<compile_context>
chip_gen: v6e
topology: v6e:2x2x1
jax: 0.10.0
libtpu: 0.0.40
codegen_flags: <defaults>
</compile_context>

<pallas_src>
import functools

import jax
import jax.numpy as jnp
from jax.experimental import pallas as pl
from jax.experimental.pallas import tpu as pltpu

_BN_EPS = 1e-5
_LANE = 128
_SUBLANE = 8


def _rup(n, m):
    return ((n + m - 1) // m) * m


def _pad2(a, rows, cols):
    r, c = a.shape
    return jnp.pad(a, ((0, rows - r), (0, cols - c)))


# ---------------------------------------------------------------------------
# Fused Pallas kernel: whole MLP, everything resident in VMEM.
# ---------------------------------------------------------------------------
def _mlp_fused_kernel(*refs, n_layers, n_valid, masked):
    refs = list(refs)
    o_ref = refs.pop()            # single output ref
    it = iter(refs)
    x_ref = next(it)
    c_ref = next(it)

    n_pad = x_ref.shape[0]
    inv_n = 1.0 / float(n_valid)
    if masked:
        row_ids = jax.lax.broadcasted_iota(jnp.int32, (n_pad, 1), 0)
        row_mask = (row_ids < n_valid).astype(jnp.float32)

    def linear(x, w_ref):
        return jnp.dot(x, w_ref[...], preferred_element_type=jnp.float32)

    def bn(y, gb_ref, relu):
        # One-pass batch statistics (pad rows of y are provably zero, so the
        # full-tile sums equal the valid-row sums).
        s = jnp.sum(y, axis=0, keepdims=True)
        sq = jnp.sum(y * y, axis=0, keepdims=True)
        mean = s * inv_n
        var = jnp.maximum(sq * inv_n - mean * mean, 0.0)
        gb = gb_ref[...]                        # (2, D): [gamma; beta]
        scale = gb[0:1, :] * jax.lax.rsqrt(var + _BN_EPS)
        shift = gb[1:2, :] - mean * scale
        out = y * scale + shift
        if relu:
            out = jnp.maximum(out, 0.0)
        if masked:
            out = out * row_mask                # keep pad rows exactly zero
        return out

    # project_input: Linear -> BN -> Linear -> BN -> ReLU (biases cancelled by BN)
    w0, gb0 = next(it), next(it)
    c = bn(linear(c_ref[...], w0), gb0, relu=False)
    w1, gb1 = next(it), next(it)
    c = bn(linear(c, w1), gb1, relu=True)

    x = x_ref[...]
    concat_idx = n_layers // 2
    for i in range(n_layers):
        if i == concat_idx:
            # concat([x, c]) @ W  ==  x @ Wa + c @ Wb  (weight split in wrapper)
            wa, wb, gb = next(it), next(it), next(it)
            y = linear(x, wa) + linear(c, wb)
        else:
            w, gb = next(it), next(it)
            y = linear(x, w)
        x = bn(y, gb, relu=True)

    # output layer: plain Linear (bias kept here)
    wo, bo = next(it), next(it)
    o_ref[...] = (linear(x, wo) + bo[...]).astype(o_ref.dtype)


# ---------------------------------------------------------------------------
# Wrapper: pad to lane-dense (8,128)-aligned tiles and launch one pallas_call.
# ---------------------------------------------------------------------------
def mlp_forward(params, x, coords, n_layers):
    n = x.shape[0]
    in_channels = x.shape[1]
    dim_coords = coords.shape[1]
    dim_project = params["proj_l0"][0].shape[1]
    feature = params["layers"][0][0][0].shape[1]
    out_channels = params["out"][0].shape[1]
    concat_idx = n_layers // 2

    n_pad = _rup(n, _SUBLANE)     # sublane-padded batch
    masked = n_pad != n
    cp = _rup(dim_coords, _LANE)  # padded coords width
    pp = _rup(dim_project, _LANE) # padded projection width
    ip = _rup(in_channels, _LANE) # padded input-feature width
    fp = _rup(feature, _LANE)     # padded hidden-feature width
    op = _rup(out_channels, _LANE)  # padded output width (lane-dense out_spec)

    args, specs = [], []

    def add(a, rows, cols):
        args.append(_pad2(a, rows, cols))
        specs.append(pl.BlockSpec((rows, cols), lambda i: (0, 0)))

    def add_bn(gamma, beta, cols):
        # Pack gamma/beta into one (2, D) tensor: one DMA instead of two.
        add(jnp.concatenate([gamma, beta], axis=0), 2, cols)

    # activations (zero row/col padding keeps pad rows/cols zero through matmuls)
    add(x, n_pad, ip)
    add(coords, n_pad, cp)

    # project_input params (linear biases dropped: cancelled by train-mode BN)
    (w0, _b0), (g0, be0) = params["proj_l0"], params["proj_bn0"]
    add(w0, cp, pp); add_bn(g0, be0, pp)
    (w1, _b1), (g1, be1) = params["proj_l1"], params["proj_bn1"]
    add(w1, pp, pp); add_bn(g1, be1, pp)

    # hidden layers
    for i in range(n_layers):
        (wl, _bl), (gl, bel) = params["layers"][i]
        xin_p = ip if i == 0 else fp
        if i == concat_idx:
            xin_valid = wl.shape[0] - dim_project
            add(wl[:xin_valid, :], xin_p, fp)   # Wa: multiplies x
            add(wl[xin_valid:, :], pp, fp)      # Wb: multiplies projected coords
        else:
            add(wl, xin_p, fp)
        add_bn(gl, bel, fp)

    # output linear (bias kept)
    wo, bo = params["out"]
    add(wo, fp, op)
    add(bo, 1, op)

    kernel = functools.partial(_mlp_fused_kernel, n_layers=n_layers,
                               n_valid=n, masked=masked)
    out_padded = pl.pallas_call(
        kernel,
        out_shape=jax.ShapeDtypeStruct((n_pad, op), jnp.float32),
        grid=(1,),
        in_specs=specs,
        out_specs=pl.BlockSpec((n_pad, op), lambda i: (0, 0)),
        compiler_params=pltpu.CompilerParams(
            dimension_semantics=("arbitrary",)),
    )(*args)
    return out_padded[:n, :out_channels]


# ---------------------------------------------------------------------------
# Parameter construction (deterministic, synthetic weights)
# ---------------------------------------------------------------------------
def _make_linear_params(key, d_in, d_out):
    kw, kb = jax.random.split(key)
    w_t = jax.random.normal(kw, (d_in, d_out), jnp.float32) * 0.1   # (Din, Dout)
    b = jax.random.normal(kb, (1, d_out), jnp.float32) * 0.01
    return w_t, b


def _make_bn_params(key, d):
    kg, kb = jax.random.split(key)
    gamma = 1.0 + 0.05 * jax.random.normal(kg, (1, d), jnp.float32)
    beta = 0.05 * jax.random.normal(kb, (1, d), jnp.float32)
    return gamma, beta


def init_mlp_params(key, in_channels, feature, dim_coords, dim_project,
                    out_channels, n_layers):
    params = {}
    keys = jax.random.split(key, 4 + 2 * n_layers + 1)
    params["proj_l0"] = _make_linear_params(keys[0], dim_coords, dim_project)
    params["proj_bn0"] = _make_bn_params(keys[1], dim_project)
    params["proj_l1"] = _make_linear_params(keys[2], dim_project, dim_project)
    params["proj_bn1"] = _make_bn_params(keys[3], dim_project)
    params["layers"] = []
    for layer in range(n_layers):
        in_feature = feature
        if layer == 0:
            in_feature = in_channels
        if layer == n_layers // 2:
            in_feature += dim_project
        lw = _make_linear_params(keys[4 + 2 * layer], in_feature, feature)
        lbn = _make_bn_params(keys[5 + 2 * layer], feature)
        params["layers"].append((lw, lbn))
    params["out"] = _make_linear_params(keys[4 + 2 * n_layers], feature, out_channels)
    return params


# ---------------------------------------------------------------------------
# Pure-JAX reference (keeps the linear bias; it cancels exactly under BN)
# ---------------------------------------------------------------------------
def _ref_linear_bn(x, w_t, b, gamma, beta, relu):
    y = x @ w_t + b
    mean = jnp.mean(y, axis=0, keepdims=True)
    var = jnp.mean((y - mean) ** 2, axis=0, keepdims=True)
    y = (y - mean) * jax.lax.rsqrt(var + _BN_EPS) * gamma + beta
    return jnp.maximum(y, 0.0) if relu else y


def mlp_forward_ref(params, x, coords, n_layers):
    (w0, b0), (g0, be0) = params["proj_l0"], params["proj_bn0"]
    c = _ref_linear_bn(coords, w0, b0, g0, be0, relu=False)
    (w1, b1), (g1, be1) = params["proj_l1"], params["proj_bn1"]
    c = _ref_linear_bn(c, w1, b1, g1, be1, relu=True)
    for i in range(n_layers):
        if i == n_layers // 2:
            x = jnp.concatenate([x, c], axis=1)
        (wl, bl), (gl, bel) = params["layers"][i]
        x = _ref_linear_bn(x, wl, bl, gl, bel, relu=True)
    wo, bo = params["out"]
    return x @ wo + bo


# ---------------------------------------------------------------------------
if __name__ == "__main__":
    # Small, module-consistent shapes.
    N = 64
    in_channels = 16
    feature = 32
    dim_coords = 3
    dim_project = 16
    out_channels = 4
    n_layers = 4

    key = jax.random.PRNGKey(0)
    k_params, k_x, k_c = jax.random.split(key, 3)

    params = init_mlp_params(k_params, in_channels, feature, dim_coords,
                             dim_project, out_channels, n_layers)
    x = jax.random.normal(k_x, (N, in_channels), jnp.float32)
    coords = jax.random.normal(k_c, (N, dim_coords), jnp.float32)

    fwd = jax.jit(functools.partial(mlp_forward, n_layers=n_layers))

    # Sublane-aligned batch (fast path: no row masking emitted).
    out = jax.block_until_ready(fwd(params, x, coords))
    ref = mlp_forward_ref(params, x, coords, n_layers)
    assert out.shape == (N, out_channels)
    assert jnp.allclose(out, ref, atol=1e-4, rtol=1e-4), "mismatch vs reference"

    # Non-multiple-of-8 batch exercises the zero-cost-when-unneeded row-mask path.
    N2 = 50
    out2 = jax.block_until_ready(fwd(params, x[:N2], coords[:N2]))
    ref2 = mlp_forward_ref(params, x[:N2], coords[:N2], n_layers)
    assert out2.shape == (N2, out_channels)
    assert jnp.allclose(out2, ref2, atol=1e-4, rtol=1e-4), "mismatch (masked batch)"

    print("KERNEL_OK")
</pallas_src>

<mosaic_0001>
module attributes {stable_mosaic.version = 11 : i64} {
  func.func @_mlp_fused_kernel(%arg0: i32, %arg1: memref<64x128xf32, #tpu.memory_space<vmem>>, %arg2: memref<64x128xf32, #tpu.memory_space<vmem>>, %arg3: memref<128x128xf32, #tpu.memory_space<vmem>>, %arg4: memref<2x128xf32, #tpu.memory_space<vmem>>, %arg5: memref<128x128xf32, #tpu.memory_space<vmem>>, %arg6: memref<2x128xf32, #tpu.memory_space<vmem>>, %arg7: memref<128x128xf32, #tpu.memory_space<vmem>>, %arg8: memref<2x128xf32, #tpu.memory_space<vmem>>, %arg9: memref<128x128xf32, #tpu.memory_space<vmem>>, %arg10: memref<2x128xf32, #tpu.memory_space<vmem>>, %arg11: memref<128x128xf32, #tpu.memory_space<vmem>>, %arg12: memref<128x128xf32, #tpu.memory_space<vmem>>, %arg13: memref<2x128xf32, #tpu.memory_space<vmem>>, %arg14: memref<128x128xf32, #tpu.memory_space<vmem>>, %arg15: memref<2x128xf32, #tpu.memory_space<vmem>>, %arg16: memref<128x128xf32, #tpu.memory_space<vmem>>, %arg17: memref<1x128xf32, #tpu.memory_space<vmem>>, %arg18: memref<64x128xf32, #tpu.memory_space<vmem>>) attributes {dimension_semantics = [#tpu.dimension_semantics<arbitrary>], iteration_bounds = array<i64: 1>, scalar_prefetch = 0 : i64, scratch_operands = 0 : i64, tpu.core_type = #tpu.core_type<tc>, window_params = [{pipeline_mode = #tpu.pipeline_mode<synchronous>, transform_indices = @transform_0, window_bounds = array<i64: 64, 128>}, {pipeline_mode = #tpu.pipeline_mode<synchronous>, transform_indices = @transform_1, window_bounds = array<i64: 64, 128>}, {pipeline_mode = #tpu.pipeline_mode<synchronous>, transform_indices = @transform_2, window_bounds = array<i64: 128, 128>}, {pipeline_mode = #tpu.pipeline_mode<synchronous>, transform_indices = @transform_3, window_bounds = array<i64: 2, 128>}, {pipeline_mode = #tpu.pipeline_mode<synchronous>, transform_indices = @transform_4, window_bounds = array<i64: 128, 128>}, {pipeline_mode = #tpu.pipeline_mode<synchronous>, transform_indices = @transform_5, window_bounds = array<i64: 2, 128>}, {pipeline_mode = #tpu.pipeline_mode<synchronous>, transform_indices = @transform_6, window_bounds = array<i64: 128, 128>}, {pipeline_mode = #tpu.pipeline_mode<synchronous>, transform_indices = @transform_7, window_bounds = array<i64: 2, 128>}, {pipeline_mode = #tpu.pipeline_mode<synchronous>, transform_indices = @transform_8, window_bounds = array<i64: 128, 128>}, {pipeline_mode = #tpu.pipeline_mode<synchronous>, transform_indices = @transform_9, window_bounds = array<i64: 2, 128>}, {pipeline_mode = #tpu.pipeline_mode<synchronous>, transform_indices = @transform_10, window_bounds = array<i64: 128, 128>}, {pipeline_mode = #tpu.pipeline_mode<synchronous>, transform_indices = @transform_11, window_bounds = array<i64: 128, 128>}, {pipeline_mode = #tpu.pipeline_mode<synchronous>, transform_indices = @transform_12, window_bounds = array<i64: 2, 128>}, {pipeline_mode = #tpu.pipeline_mode<synchronous>, transform_indices = @transform_13, window_bounds = array<i64: 128, 128>}, {pipeline_mode = #tpu.pipeline_mode<synchronous>, transform_indices = @transform_14, window_bounds = array<i64: 2, 128>}, {pipeline_mode = #tpu.pipeline_mode<synchronous>, transform_indices = @transform_15, window_bounds = array<i64: 128, 128>}, {pipeline_mode = #tpu.pipeline_mode<synchronous>, transform_indices = @transform_16, window_bounds = array<i64: 1, 128>}, {pipeline_mode = #tpu.pipeline_mode<synchronous>, transform_indices = @transform_17, window_bounds = array<i64: 64, 128>}]} {
    %c0 = arith.constant 0 : index
    %c0_0 = arith.constant 0 : index
    %0 = vector.load %arg2[%c0, %c0_0] : memref<64x128xf32, #tpu.memory_space<vmem>>, vector<64x128xf32>
    %c0_1 = arith.constant 0 : index
    %c0_2 = arith.constant 0 : index
    %1 = vector.load %arg3[%c0_1, %c0_2] : memref<128x128xf32, #tpu.memory_space<vmem>>, vector<128x128xf32>
    %cst = arith.constant dense<0.000000e+00> : vector<64x128xf32>
    %2 = tpu.matmul %0, %1, %cst {dimension_numbers = #tpu.dot_dimension_numbers<[1], [0], [0], [1], [0, 0, 1, 1], [], []>} : vector<64x128xf32>, vector<128x128xf32>, vector<64x128xf32> -> vector<64x128xf32>
    %cst_3 = arith.constant dense<0.000000e+00> : vector<128xf32>
    %3 = vector.multi_reduction <add>, %2, %cst_3 [0] : vector<64x128xf32> to vector<128xf32>
    %4 = vector.shape_cast %3 : vector<128xf32> to vector<1x128xf32>
    %5 = arith.mulf %2, %2 : vector<64x128xf32>
    %cst_4 = arith.constant dense<0.000000e+00> : vector<128xf32>
    %6 = vector.multi_reduction <add>, %5, %cst_4 [0] : vector<64x128xf32> to vector<128xf32>
    %7 = vector.shape_cast %6 : vector<128xf32> to vector<1x128xf32>
    %cst_5 = arith.constant 1.562500e-02 : f32
    %8 = vector.broadcast %cst_5 : f32 to vector<1x128xf32>
    %9 = arith.mulf %4, %8 : vector<1x128xf32>
    %cst_6 = arith.constant 1.562500e-02 : f32
    %10 = vector.broadcast %cst_6 : f32 to vector<1x128xf32>
    %11 = arith.mulf %7, %10 : vector<1x128xf32>
    %12 = arith.mulf %9, %9 : vector<1x128xf32>
    %13 = arith.subf %11, %12 : vector<1x128xf32>
    %cst_7 = arith.constant 0.000000e+00 : f32
    %14 = vector.broadcast %cst_7 : f32 to vector<1x128xf32>
    %15 = arith.maximumf %13, %14 : vector<1x128xf32>
    %c0_8 = arith.constant 0 : index
    %c0_9 = arith.constant 0 : index
    %16 = vector.load %arg4[%c0_8, %c0_9] : memref<2x128xf32, #tpu.memory_space<vmem>>, vector<2x128xf32>
    %17 = vector.extract_strided_slice %16 {offsets = [0, 0], sizes = [1, 128], strides = [1, 1]} : vector<2x128xf32> to vector<1x128xf32>
    %cst_10 = arith.constant 9.99999974E-6 : f32
    %18 = vector.broadcast %cst_10 : f32 to vector<1x128xf32>
    %19 = arith.addf %15, %18 : vector<1x128xf32>
    %20 = math.rsqrt %19 : vector<1x128xf32>
    %21 = arith.mulf %17, %20 : vector<1x128xf32>
    %22 = vector.extract_strided_slice %16 {offsets = [1, 0], sizes = [1, 128], strides = [1, 1]} : vector<2x128xf32> to vector<1x128xf32>
    %23 = arith.mulf %9, %21 : vector<1x128xf32>
    %24 = arith.subf %22, %23 : vector<1x128xf32>
    %25 = vector.broadcast %21 : vector<1x128xf32> to vector<64x128xf32>
    %26 = arith.mulf %2, %25 : vector<64x128xf32>
    %27 = vector.broadcast %24 : vector<1x128xf32> to vector<64x128xf32>
    %28 = arith.addf %26, %27 : vector<64x128xf32>
    %c0_11 = arith.constant 0 : index
    %c0_12 = arith.constant 0 : index
    %29 = vector.load %arg5[%c0_11, %c0_12] : memref<128x128xf32, #tpu.memory_space<vmem>>, vector<128x128xf32>
    %cst_13 = arith.constant dense<0.000000e+00> : vector<64x128xf32>
    %30 = tpu.matmul %28, %29, %cst_13 {dimension_numbers = #tpu.dot_dimension_numbers<[1], [0], [0], [1], [0, 0, 1, 1], [], []>} : vector<64x128xf32>, vector<128x128xf32>, vector<64x128xf32> -> vector<64x128xf32>
    %cst_14 = arith.constant dense<0.000000e+00> : vector<128xf32>
    %31 = vector.multi_reduction <add>, %30, %cst_14 [0] : vector<64x128xf32> to vector<128xf32>
    %32 = vector.shape_cast %31 : vector<128xf32> to vector<1x128xf32>
    %33 = arith.mulf %30, %30 : vector<64x128xf32>
    %cst_15 = arith.constant dense<0.000000e+00> : vector<128xf32>
    %34 = vector.multi_reduction <add>, %33, %cst_15 [0] : vector<64x128xf32> to vector<128xf32>
    %35 = vector.shape_cast %34 : vector<128xf32> to vector<1x128xf32>
    %cst_16 = arith.constant 1.562500e-02 : f32
    %36 = vector.broadcast %cst_16 : f32 to vector<1x128xf32>
    %37 = arith.mulf %32, %36 : vector<1x128xf32>
    %cst_17 = arith.constant 1.562500e-02 : f32
    %38 = vector.broadcast %cst_17 : f32 to vector<1x128xf32>
    %39 = arith.mulf %35, %38 : vector<1x128xf32>
    %40 = arith.mulf %37, %37 : vector<1x128xf32>
    %41 = arith.subf %39, %40 : vector<1x128xf32>
    %cst_18 = arith.constant 0.000000e+00 : f32
    %42 = vector.broadcast %cst_18 : f32 to vector<1x128xf32>
    %43 = arith.maximumf %41, %42 : vector<1x128xf32>
    %c0_19 = arith.constant 0 : index
    %c0_20 = arith.constant 0 : index
    %44 = vector.load %arg6[%c0_19, %c0_20] : memref<2x128xf32, #tpu.memory_space<vmem>>, vector<2x128xf32>
    %45 = vector.extract_strided_slice %44 {offsets = [0, 0], sizes = [1, 128], strides = [1, 1]} : vector<2x128xf32> to vector<1x128xf32>
    %cst_21 = arith.constant 9.99999974E-6 : f32
    %46 = vector.broadcast %cst_21 : f32 to vector<1x128xf32>
    %47 = arith.addf %43, %46 : vector<1x128xf32>
    %48 = math.rsqrt %47 : vector<1x128xf32>
    %49 = arith.mulf %45, %48 : vector<1x128xf32>
    %50 = vector.extract_strided_slice %44 {offsets = [1, 0], sizes = [1, 128], strides = [1, 1]} : vector<2x128xf32> to vector<1x128xf32>
    %51 = arith.mulf %37, %49 : vector<1x128xf32>
    %52 = arith.subf %50, %51 : vector<1x128xf32>
    %53 = vector.broadcast %49 : vector<1x128xf32> to vector<64x128xf32>
    %54 = arith.mulf %30, %53 : vector<64x128xf32>
    %55 = vector.broadcast %52 : vector<1x128xf32> to vector<64x128xf32>
    %56 = arith.addf %54, %55 : vector<64x128xf32>
    %cst_22 = arith.constant 0.000000e+00 : f32
    %57 = vector.broadcast %cst_22 : f32 to vector<64x128xf32>
    %58 = arith.maximumf %56, %57 : vector<64x128xf32>
    %c0_23 = arith.constant 0 : index
    %c0_24 = arith.constant 0 : index
    %59 = vector.load %arg1[%c0_23, %c0_24] : memref<64x128xf32, #tpu.memory_space<vmem>>, vector<64x128xf32>
    %c0_25 = arith.constant 0 : index
    %c0_26 = arith.constant 0 : index
    %60 = vector.load %arg7[%c0_25, %c0_26] : memref<128x128xf32, #tpu.memory_space<vmem>>, vector<128x128xf32>
    %cst_27 = arith.constant dense<0.000000e+00> : vector<64x128xf32>
    %61 = tpu.matmul %59, %60, %cst_27 {dimension_numbers = #tpu.dot_dimension_numbers<[1], [0], [0], [1], [0, 0, 1, 1], [], []>} : vector<64x128xf32>, vector<128x128xf32>, vector<64x128xf32> -> vector<64x128xf32>
    %cst_28 = arith.constant dense<0.000000e+00> : vector<128xf32>
    %62 = vector.multi_reduction <add>, %61, %cst_28 [0] : vector<64x128xf32> to vector<128xf32>
    %63 = vector.shape_cast %62 : vector<128xf32> to vector<1x128xf32>
    %64 = arith.mulf %61, %61 : vector<64x128xf32>
    %cst_29 = arith.constant dense<0.000000e+00> : vector<128xf32>
    %65 = vector.multi_reduction <add>, %64, %cst_29 [0] : vector<64x128xf32> to vector<128xf32>
    %66 = vector.shape_cast %65 : vector<128xf32> to vector<1x128xf32>
    %cst_30 = arith.constant 1.562500e-02 : f32
    %67 = vector.broadcast %cst_30 : f32 to vector<1x128xf32>
    %68 = arith.mulf %63, %67 : vector<1x128xf32>
    %cst_31 = arith.constant 1.562500e-02 : f32
    %69 = vector.broadcast %cst_31 : f32 to vector<1x128xf32>
    %70 = arith.mulf %66, %69 : vector<1x128xf32>
    %71 = arith.mulf %68, %68 : vector<1x128xf32>
    %72 = arith.subf %70, %71 : vector<1x128xf32>
    %cst_32 = arith.constant 0.000000e+00 : f32
    %73 = vector.broadcast %cst_32 : f32 to vector<1x128xf32>
    %74 = arith.maximumf %72, %73 : vector<1x128xf32>
    %c0_33 = arith.constant 0 : index
    %c0_34 = arith.constant 0 : index
    %75 = vector.load %arg8[%c0_33, %c0_34] : memref<2x128xf32, #tpu.memory_space<vmem>>, vector<2x128xf32>
    %76 = vector.extract_strided_slice %75 {offsets = [0, 0], sizes = [1, 128], strides = [1, 1]} : vector<2x128xf32> to vector<1x128xf32>
    %cst_35 = arith.constant 9.99999974E-6 : f32
    %77 = vector.broadcast %cst_35 : f32 to vector<1x128xf32>
    %78 = arith.addf %74, %77 : vector<1x128xf32>
    %79 = math.rsqrt %78 : vector<1x128xf32>
    %80 = arith.mulf %76, %79 : vector<1x128xf32>
    %81 = vector.extract_strided_slice %75 {offsets = [1, 0], sizes = [1, 128], strides = [1, 1]} : vector<2x128xf32> to vector<1x128xf32>
    %82 = arith.mulf %68, %80 : vector<1x128xf32>
    %83 = arith.subf %81, %82 : vector<1x128xf32>
    %84 = vector.broadcast %80 : vector<1x128xf32> to vector<64x128xf32>
    %85 = arith.mulf %61, %84 : vector<64x128xf32>
    %86 = vector.broadcast %83 : vector<1x128xf32> to vector<64x128xf32>
    %87 = arith.addf %85, %86 : vector<64x128xf32>
    %cst_36 = arith.constant 0.000000e+00 : f32
    %88 = vector.broadcast %cst_36 : f32 to vector<64x128xf32>
    %89 = arith.maximumf %87, %88 : vector<64x128xf32>
    %c0_37 = arith.constant 0 : index
    %c0_38 = arith.constant 0 : index
    %90 = vector.load %arg9[%c0_37, %c0_38] : memref<128x128xf32, #tpu.memory_space<vmem>>, vector<128x128xf32>
    %cst_39 = arith.constant dense<0.000000e+00> : vector<64x128xf32>
    %91 = tpu.matmul %89, %90, %cst_39 {dimension_numbers = #tpu.dot_dimension_numbers<[1], [0], [0], [1], [0, 0, 1, 1], [], []>} : vector<64x128xf32>, vector<128x128xf32>, vector<64x128xf32> -> vector<64x128xf32>
    %cst_40 = arith.constant dense<0.000000e+00> : vector<128xf32>
    %92 = vector.multi_reduction <add>, %91, %cst_40 [0] : vector<64x128xf32> to vector<128xf32>
    %93 = vector.shape_cast %92 : vector<128xf32> to vector<1x128xf32>
    %94 = arith.mulf %91, %91 : vector<64x128xf32>
    %cst_41 = arith.constant dense<0.000000e+00> : vector<128xf32>
    %95 = vector.multi_reduction <add>, %94, %cst_41 [0] : vector<64x128xf32> to vector<128xf32>
    %96 = vector.shape_cast %95 : vector<128xf32> to vector<1x128xf32>
    %cst_42 = arith.constant 1.562500e-02 : f32
    %97 = vector.broadcast %cst_42 : f32 to vector<1x128xf32>
    %98 = arith.mulf %93, %97 : vector<1x128xf32>
    %cst_43 = arith.constant 1.562500e-02 : f32
    %99 = vector.broadcast %cst_43 : f32 to vector<1x128xf32>
    %100 = arith.mulf %96, %99 : vector<1x128xf32>
    %101 = arith.mulf %98, %98 : vector<1x128xf32>
    %102 = arith.subf %100, %101 : vector<1x128xf32>
    %cst_44 = arith.constant 0.000000e+00 : f32
    %103 = vector.broadcast %cst_44 : f32 to vector<1x128xf32>
    %104 = arith.maximumf %102, %103 : vector<1x128xf32>
    %c0_45 = arith.constant 0 : index
    %c0_46 = arith.constant 0 : index
    %105 = vector.load %arg10[%c0_45, %c0_46] : memref<2x128xf32, #tpu.memory_space<vmem>>, vector<2x128xf32>
    %106 = vector.extract_strided_slice %105 {offsets = [0, 0], sizes = [1, 128], strides = [1, 1]} : vector<2x128xf32> to vector<1x128xf32>
    %cst_47 = arith.constant 9.99999974E-6 : f32
    %107 = vector.broadcast %cst_47 : f32 to vector<1x128xf32>
    %108 = arith.addf %104, %107 : vector<1x128xf32>
    %109 = math.rsqrt %108 : vector<1x128xf32>
    %110 = arith.mulf %106, %109 : vector<1x128xf32>
    %111 = vector.extract_strided_slice %105 {offsets = [1, 0], sizes = [1, 128], strides = [1, 1]} : vector<2x128xf32> to vector<1x128xf32>
    %112 = arith.mulf %98, %110 : vector<1x128xf32>
    %113 = arith.subf %111, %112 : vector<1x128xf32>
    %114 = vector.broadcast %110 : vector<1x128xf32> to vector<64x128xf32>
    %115 = arith.mulf %91, %114 : vector<64x128xf32>
    %116 = vector.broadcast %113 : vector<1x128xf32> to vector<64x128xf32>
    %117 = arith.addf %115, %116 : vector<64x128xf32>
    %cst_48 = arith.constant 0.000000e+00 : f32
    %118 = vector.broadcast %cst_48 : f32 to vector<64x128xf32>
    %119 = arith.maximumf %117, %118 : vector<64x128xf32>
    %c0_49 = arith.constant 0 : index
    %c0_50 = arith.constant 0 : index
    %120 = vector.load %arg11[%c0_49, %c0_50] : memref<128x128xf32, #tpu.memory_space<vmem>>, vector<128x128xf32>
    %cst_51 = arith.constant dense<0.000000e+00> : vector<64x128xf32>
    %121 = tpu.matmul %119, %120, %cst_51 {dimension_numbers = #tpu.dot_dimension_numbers<[1], [0], [0], [1], [0, 0, 1, 1], [], []>} : vector<64x128xf32>, vector<128x128xf32>, vector<64x128xf32> -> vector<64x128xf32>
    %c0_52 = arith.constant 0 : index
    %c0_53 = arith.constant 0 : index
    %122 = vector.load %arg12[%c0_52, %c0_53] : memref<128x128xf32, #tpu.memory_space<vmem>>, vector<128x128xf32>
    %cst_54 = arith.constant dense<0.000000e+00> : vector<64x128xf32>
    %123 = tpu.matmul %58, %122, %cst_54 {dimension_numbers = #tpu.dot_dimension_numbers<[1], [0], [0], [1], [0, 0, 1, 1], [], []>} : vector<64x128xf32>, vector<128x128xf32>, vector<64x128xf32> -> vector<64x128xf32>
    %124 = arith.addf %121, %123 : vector<64x128xf32>
    %cst_55 = arith.constant dense<0.000000e+00> : vector<128xf32>
    %125 = vector.multi_reduction <add>, %124, %cst_55 [0] : vector<64x128xf32> to vector<128xf32>
    %126 = vector.shape_cast %125 : vector<128xf32> to vector<1x128xf32>
    %127 = arith.mulf %124, %124 : vector<64x128xf32>
    %cst_56 = arith.constant dense<0.000000e+00> : vector<128xf32>
    %128 = vector.multi_reduction <add>, %127, %cst_56 [0] : vector<64x128xf32> to vector<128xf32>
    %129 = vector.shape_cast %128 : vector<128xf32> to vector<1x128xf32>
    %cst_57 = arith.constant 1.562500e-02 : f32
    %130 = vector.broadcast %cst_57 : f32 to vector<1x128xf32>
    %131 = arith.mulf %126, %130 : vector<1x128xf32>
    %cst_58 = arith.constant 1.562500e-02 : f32
    %132 = vector.broadcast %cst_58 : f32 to vector<1x128xf32>
    %133 = arith.mulf %129, %132 : vector<1x128xf32>
    %134 = arith.mulf %131, %131 : vector<1x128xf32>
    %135 = arith.subf %133, %134 : vector<1x128xf32>
    %cst_59 = arith.constant 0.000000e+00 : f32
    %136 = vector.broadcast %cst_59 : f32 to vector<1x128xf32>
    %137 = arith.maximumf %135, %136 : vector<1x128xf32>
    %c0_60 = arith.constant 0 : index
    %c0_61 = arith.constant 0 : index
    %138 = vector.load %arg13[%c0_60, %c0_61] : memref<2x128xf32, #tpu.memory_space<vmem>>, vector<2x128xf32>
    %139 = vector.extract_strided_slice %138 {offsets = [0, 0], sizes = [1, 128], strides = [1, 1]} : vector<2x128xf32> to vector<1x128xf32>
    %cst_62 = arith.constant 9.99999974E-6 : f32
    %140 = vector.broadcast %cst_62 : f32 to vector<1x128xf32>
    %141 = arith.addf %137, %140 : vector<1x128xf32>
    %142 = math.rsqrt %141 : vector<1x128xf32>
    %143 = arith.mulf %139, %142 : vector<1x128xf32>
    %144 = vector.extract_strided_slice %138 {offsets = [1, 0], sizes = [1, 128], strides = [1, 1]} : vector<2x128xf32> to vector<1x128xf32>
    %145 = arith.mulf %131, %143 : vector<1x128xf32>
    %146 = arith.subf %144, %145 : vector<1x128xf32>
    %147 = vector.broadcast %143 : vector<1x128xf32> to vector<64x128xf32>
    %148 = arith.mulf %124, %147 : vector<64x128xf32>
    %149 = vector.broadcast %146 : vector<1x128xf32> to vector<64x128xf32>
    %150 = arith.addf %148, %149 : vector<64x128xf32>
    %cst_63 = arith.constant 0.000000e+00 : f32
    %151 = vector.broadcast %cst_63 : f32 to vector<64x128xf32>
    %152 = arith.maximumf %150, %151 : vector<64x128xf32>
    %c0_64 = arith.constant 0 : index
    %c0_65 = arith.constant 0 : index
    %153 = vector.load %arg14[%c0_64, %c0_65] : memref<128x128xf32, #tpu.memory_space<vmem>>, vector<128x128xf32>
    %cst_66 = arith.constant dense<0.000000e+00> : vector<64x128xf32>
    %154 = tpu.matmul %152, %153, %cst_66 {dimension_numbers = #tpu.dot_dimension_numbers<[1], [0], [0], [1], [0, 0, 1, 1], [], []>} : vector<64x128xf32>, vector<128x128xf32>, vector<64x128xf32> -> vector<64x128xf32>
    %cst_67 = arith.constant dense<0.000000e+00> : vector<128xf32>
    %155 = vector.multi_reduction <add>, %154, %cst_67 [0] : vector<64x128xf32> to vector<128xf32>
    %156 = vector.shape_cast %155 : vector<128xf32> to vector<1x128xf32>
    %157 = arith.mulf %154, %154 : vector<64x128xf32>
    %cst_68 = arith.constant dense<0.000000e+00> : vector<128xf32>
    %158 = vector.multi_reduction <add>, %157, %cst_68 [0] : vector<64x128xf32> to vector<128xf32>
    %159 = vector.shape_cast %158 : vector<128xf32> to vector<1x128xf32>
    %cst_69 = arith.constant 1.562500e-02 : f32
    %160 = vector.broadcast %cst_69 : f32 to vector<1x128xf32>
    %161 = arith.mulf %156, %160 : vector<1x128xf32>
    %cst_70 = arith.constant 1.562500e-02 : f32
    %162 = vector.broadcast %cst_70 : f32 to vector<1x128xf32>
    %163 = arith.mulf %159, %162 : vector<1x128xf32>
    %164 = arith.mulf %161, %161 : vector<1x128xf32>
    %165 = arith.subf %163, %164 : vector<1x128xf32>
    %cst_71 = arith.constant 0.000000e+00 : f32
    %166 = vector.broadcast %cst_71 : f32 to vector<1x128xf32>
    %167 = arith.maximumf %165, %166 : vector<1x128xf32>
    %c0_72 = arith.constant 0 : index
    %c0_73 = arith.constant 0 : index
    %168 = vector.load %arg15[%c0_72, %c0_73] : memref<2x128xf32, #tpu.memory_space<vmem>>, vector<2x128xf32>
    %169 = vector.extract_strided_slice %168 {offsets = [0, 0], sizes = [1, 128], strides = [1, 1]} : vector<2x128xf32> to vector<1x128xf32>
    %cst_74 = arith.constant 9.99999974E-6 : f32
    %170 = vector.broadcast %cst_74 : f32 to vector<1x128xf32>
    %171 = arith.addf %167, %170 : vector<1x128xf32>
    %172 = math.rsqrt %171 : vector<1x128xf32>
    %173 = arith.mulf %169, %172 : vector<1x128xf32>
    %174 = vector.extract_strided_slice %168 {offsets = [1, 0], sizes = [1, 128], strides = [1, 1]} : vector<2x128xf32> to vector<1x128xf32>
    %175 = arith.mulf %161, %173 : vector<1x128xf32>
    %176 = arith.subf %174, %175 : vector<1x128xf32>
    %177 = vector.broadcast %173 : vector<1x128xf32> to vector<64x128xf32>
    %178 = arith.mulf %154, %177 : vector<64x128xf32>
    %179 = vector.broadcast %176 : vector<1x128xf32> to vector<64x128xf32>
    %180 = arith.addf %178, %179 : vector<64x128xf32>
    %cst_75 = arith.constant 0.000000e+00 : f32
    %181 = vector.broadcast %cst_75 : f32 to vector<64x128xf32>
    %182 = arith.maximumf %180, %181 : vector<64x128xf32>
    %c0_76 = arith.constant 0 : index
    %c0_77 = arith.constant 0 : index
    %183 = vector.load %arg16[%c0_76, %c0_77] : memref<128x128xf32, #tpu.memory_space<vmem>>, vector<128x128xf32>
    %cst_78 = arith.constant dense<0.000000e+00> : vector<64x128xf32>
    %184 = tpu.matmul %182, %183, %cst_78 {dimension_numbers = #tpu.dot_dimension_numbers<[1], [0], [0], [1], [0, 0, 1, 1], [], []>} : vector<64x128xf32>, vector<128x128xf32>, vector<64x128xf32> -> vector<64x128xf32>
    %c0_79 = arith.constant 0 : index
    %c0_80 = arith.constant 0 : index
    %185 = vector.load %arg17[%c0_79, %c0_80] : memref<1x128xf32, #tpu.memory_space<vmem>>, vector<1x128xf32>
    %186 = vector.broadcast %185 : vector<1x128xf32> to vector<64x128xf32>
    %187 = arith.addf %184, %186 : vector<64x128xf32>
    %c0_81 = arith.constant 0 : index
    %c0_82 = arith.constant 0 : index
    %188 = vector.load %arg18[%c0_81, %c0_82] : memref<64x128xf32, #tpu.memory_space<vmem>>, vector<64x128xf32>
    tpu.vector_store %arg18[%c0_81, %c0_82], %187 {strides = array<i32>} : memref<64x128xf32, #tpu.memory_space<vmem>>, vector<64x128xf32>,
    return
  }
  func.func @transform_0(%arg0: i32) -> (i32, i32) {
    %c0_i32 = arith.constant 0 : i32
    %c0_i32_0 = arith.constant 0 : i32
    %c0_i32_1 = arith.constant 0 : i32
    return %c0_i32, %c0_i32_0 : i32, i32
  }
  func.func @transform_1(%arg0: i32) -> (i32, i32) {
    %c0_i32 = arith.constant 0 : i32
    %c0_i32_0 = arith.constant 0 : i32
    %c0_i32_1 = arith.constant 0 : i32
    return %c0_i32, %c0_i32_0 : i32, i32
  }
  func.func @transform_2(%arg0: i32) -> (i32, i32) {
    %c0_i32 = arith.constant 0 : i32
    %c0_i32_0 = arith.constant 0 : i32
    %c0_i32_1 = arith.constant 0 : i32
    return %c0_i32, %c0_i32_0 : i32, i32
  }
  func.func @transform_3(%arg0: i32) -> (i32, i32) {
    %c0_i32 = arith.constant 0 : i32
    %c0_i32_0 = arith.constant 0 : i32
    %c0_i32_1 = arith.constant 0 : i32
    return %c0_i32, %c0_i32_0 : i32, i32
  }
  func.func @transform_4(%arg0: i32) -> (i32, i32) {
    %c0_i32 = arith.constant 0 : i32
    %c0_i32_0 = arith.constant 0 : i32
    %c0_i32_1 = arith.constant 0 : i32
    return %c0_i32, %c0_i32_0 : i32, i32
  }
  func.func @transform_5(%arg0: i32) -> (i32, i32) {
    %c0_i32 = arith.constant 0 : i32
    %c0_i32_0 = arith.constant 0 : i32
    %c0_i32_1 = arith.constant 0 : i32
    return %c0_i32, %c0_i32_0 : i32, i32
  }
  func.func @transform_6(%arg0: i32) -> (i32, i32) {
    %c0_i32 = arith.constant 0 : i32
    %c0_i32_0 = arith.constant 0 : i32
    %c0_i32_1 = arith.constant 0 : i32
    return %c0_i32, %c0_i32_0 : i32, i32
  }
  func.func @transform_7(%arg0: i32) -> (i32, i32) {
    %c0_i32 = arith.constant 0 : i32
    %c0_i32_0 = arith.constant 0 : i32
    %c0_i32_1 = arith.constant 0 : i32
    return %c0_i32, %c0_i32_0 : i32, i32
  }
  func.func @transform_8(%arg0: i32) -> (i32, i32) {
    %c0_i32 = arith.constant 0 : i32
    %c0_i32_0 = arith.constant 0 : i32
    %c0_i32_1 = arith.constant 0 : i32
    return %c0_i32, %c0_i32_0 : i32, i32
  }
  func.func @transform_9(%arg0: i32) -> (i32, i32) {
    %c0_i32 = arith.constant 0 : i32
    %c0_i32_0 = arith.constant 0 : i32
    %c0_i32_1 = arith.constant 0 : i32
    return %c0_i32, %c0_i32_0 : i32, i32
  }
  func.func @transform_10(%arg0: i32) -> (i32, i32) {
    %c0_i32 = arith.constant 0 : i32
    %c0_i32_0 = arith.constant 0 : i32
    %c0_i32_1 = arith.constant 0 : i32
    return %c0_i32, %c0_i32_0 : i32, i32
  }
  func.func @transform_11(%arg0: i32) -> (i32, i32) {
    %c0_i32 = arith.constant 0 : i32
    %c0_i32_0 = arith.constant 0 : i32
    %c0_i32_1 = arith.constant 0 : i32
    return %c0_i32, %c0_i32_0 : i32, i32
  }
  func.func @transform_12(%arg0: i32) -> (i32, i32) {
    %c0_i32 = arith.constant 0 : i32
    %c0_i32_0 = arith.constant 0 : i32
    %c0_i32_1 = arith.constant 0 : i32
    return %c0_i32, %c0_i32_0 : i32, i32
  }
  func.func @transform_13(%arg0: i32) -> (i32, i32) {
    %c0_i32 = arith.constant 0 : i32
    %c0_i32_0 = arith.constant 0 : i32
    %c0_i32_1 = arith.constant 0 : i32
    return %c0_i32, %c0_i32_0 : i32, i32
  }
  func.func @transform_14(%arg0: i32) -> (i32, i32) {
    %c0_i32 = arith.constant 0 : i32
    %c0_i32_0 = arith.constant 0 : i32
    %c0_i32_1 = arith.constant 0 : i32
    return %c0_i32, %c0_i32_0 : i32, i32
  }
  func.func @transform_15(%arg0: i32) -> (i32, i32) {
    %c0_i32 = arith.constant 0 : i32
    %c0_i32_0 = arith.constant 0 : i32
    %c0_i32_1 = arith.constant 0 : i32
    return %c0_i32, %c0_i32_0 : i32, i32
  }
  func.func @transform_16(%arg0: i32) -> (i32, i32) {
    %c0_i32 = arith.constant 0 : i32
    %c0_i32_0 = arith.constant 0 : i32
    %c0_i32_1 = arith.constant 0 : i32
    return %c0_i32, %c0_i32_0 : i32, i32
  }
  func.func @transform_17(%arg0: i32) -> (i32, i32) {
    %c0_i32 = arith.constant 0 : i32
    %c0_i32_0 = arith.constant 0 : i32
    %c0_i32_1 = arith.constant 0 : i32
    return %c0_i32, %c0_i32_0 : i32, i32
  }
}

</mosaic_0001>

<llo_original>
// kernel: mlp_forward.1
$region0: #{mlp_forward.1}
  #allocation0 [shape = 'u32[]', space=smem, size = 0x4, offset = 0x4, fixed_abs, tag = 'smem constant byte address 0x4 - core index']
  #allocation1 [shape = 'u32[144,128]{1,0:T(1,128)}', space=vmem, size = 0x12000, scoped, tag = 'internal scratch']
  %s0 = inlined_call_operand.vmem [shape: f32[64,128], index: 0, kind: input, shape index: {}]
  %s1 = inlined_call_operand.vmem [shape: f32[64,128], index: 1, kind: input, shape index: {}]
  %s2 = inlined_call_operand.vmem [shape: f32[128,128], index: 2, kind: input, shape index: {}]
  %s3 = inlined_call_operand.vmem [shape: f32[2,128], index: 3, kind: input, shape index: {}]
  %s4 = inlined_call_operand.vmem [shape: f32[128,128], index: 4, kind: input, shape index: {}]
  %s5 = inlined_call_operand.vmem [shape: f32[2,128], index: 5, kind: input, shape index: {}]
  %s6 = inlined_call_operand.vmem [shape: f32[128,128], index: 6, kind: input, shape index: {}]
  %s7 = inlined_call_operand.vmem [shape: f32[2,128], index: 7, kind: input, shape index: {}]
  %s8 = inlined_call_operand.vmem [shape: f32[128,128], index: 8, kind: input, shape index: {}]
  %s9 = inlined_call_operand.vmem [shape: f32[2,128], index: 9, kind: input, shape index: {}]
  %s10 = inlined_call_operand.vmem [shape: f32[128,128], index: 10, kind: input, shape index: {}]
  %s11 = inlined_call_operand.vmem [shape: f32[128,128], index: 11, kind: input, shape index: {}]
  %s12 = inlined_call_operand.vmem [shape: f32[2,128], index: 12, kind: input, shape index: {}]
  %s13 = inlined_call_operand.vmem [shape: f32[128,128], index: 13, kind: input, shape index: {}]
  %s14 = inlined_call_operand.vmem [shape: f32[2,128], index: 14, kind: input, shape index: {}]
  %s15 = inlined_call_operand.vmem [shape: f32[128,128], index: 15, kind: input, shape index: {}]
  %s16 = inlined_call_operand.vmem [shape: f32[1,128], index: 16, kind: input, shape index: {}]
  %s17 = inlined_call_operand.vmem [shape: f32[64,128], index: 17, kind: output, shape index: {}]
  %s18 = sld [smem:[#allocation0]]
  $region78: #{mlp_forward.1} parent=0
    _
  %s20 = ssub.s32 1, %s18
  %s21 = scalar_select 0, %s20, %s18
  // Predicated region
  $region2: #{mlp_forward.1} parent=0 // pred_check
    _
  $region3: #{mlp_forward.1} parent=0 // pred_check_branch
    %23 = sbr.rel (0) target = $region5
  $region4: #{mlp_forward.1} parent=0 // pred_region
    _
  $region5: #{mlp_forward.1} parent=0 // pred_fallthru
    _
  // Predicated region
  $region6: #{mlp_forward.1} parent=0 // pred_check
    _
  $region7: #{mlp_forward.1} parent=0 // pred_check_branch
    %25 = sbr.rel (0) target = $region9
  $region8: #{mlp_forward.1} parent=0 // pred_region
    _
  $region9: #{mlp_forward.1} parent=0 // pred_fallthru
    _
  // Predicated region
  $region10: #{mlp_forward.1} parent=0 // pred_check
    _
  $region11: #{mlp_forward.1} parent=0 // pred_check_branch
    %27 = sbr.rel (0) target = $region13
  $region12: #{mlp_forward.1} parent=0 // pred_region
    _
  $region13: #{mlp_forward.1} parent=0 // pred_fallthru
    _
  // Predicated region
  $region14: #{mlp_forward.1} parent=0 // pred_check
    _
  $region15: #{mlp_forward.1} parent=0 // pred_check_branch
    %29 = sbr.rel (0) target = $region17
  $region16: #{mlp_forward.1} parent=0 // pred_region
    _
  $region17: #{mlp_forward.1} parent=0 // pred_fallthru
    _
  // Predicated region
  $region18: #{mlp_forward.1} parent=0 // pred_check
    _
  $region19: #{mlp_forward.1} parent=0 // pred_check_branch
    %31 = sbr.rel (0) target = $region21
  $region20: #{mlp_forward.1} parent=0 // pred_region
    _
  $region21: #{mlp_forward.1} parent=0 // pred_fallthru
    _
  // Predicated region
  $region22: #{mlp_forward.1} parent=0 // pred_check
    _
  $region23: #{mlp_forward.1} parent=0 // pred_check_branch
    %33 = sbr.rel (0) target = $region25
  $region24: #{mlp_forward.1} parent=0 // pred_region
    _
  $region25: #{mlp_forward.1} parent=0 // pred_fallthru
    _
  // Predicated region
  $region26: #{mlp_forward.1} parent=0 // pred_check
    _
  $region27: #{mlp_forward.1} parent=0 // pred_check_branch
    %35 = sbr.rel (0) target = $region29
  $region28: #{mlp_forward.1} parent=0 // pred_region
    _
  $region29: #{mlp_forward.1} parent=0 // pred_fallthru
    _
  // Predicated region
  $region30: #{mlp_forward.1} parent=0 // pred_check
    _
  $region31: #{mlp_forward.1} parent=0 // pred_check_branch
    %37 = sbr.rel (0) target = $region33
  $region32: #{mlp_forward.1} parent=0 // pred_region
    _
  $region33: #{mlp_forward.1} parent=0 // pred_fallthru
    _
  // Predicated region
  $region34: #{mlp_forward.1} parent=0 // pred_check
    _
  $region35: #{mlp_forward.1} parent=0 // pred_check_branch
    %39 = sbr.rel (0) target = $region37
  $region36: #{mlp_forward.1} parent=0 // pred_region
    _
  $region37: #{mlp_forward.1} parent=0 // pred_fallthru
    _
  // Predicated region
  $region38: #{mlp_forward.1} parent=0 // pred_check
    _
  $region39: #{mlp_forward.1} parent=0 // pred_check_branch
    %41 = sbr.rel (0) target = $region41
  $region40: #{mlp_forward.1} parent=0 // pred_region
    _
  $region41: #{mlp_forward.1} parent=0 // pred_fallthru
    _
  // Predicated region
  $region42: #{mlp_forward.1} parent=0 // pred_check
    _
  $region43: #{mlp_forward.1} parent=0 // pred_check_branch
    %43 = sbr.rel (0) target = $region45
  $region44: #{mlp_forward.1} parent=0 // pred_region
    _
  $region45: #{mlp_forward.1} parent=0 // pred_fallthru
    _
  // Predicated region
  $region46: #{mlp_forward.1} parent=0 // pred_check
    _
  $region47: #{mlp_forward.1} parent=0 // pred_check_branch
    %45 = sbr.rel (0) target = $region49
  $region48: #{mlp_forward.1} parent=0 // pred_region
    _
  $region49: #{mlp_forward.1} parent=0 // pred_fallthru
    _
  // Predicated region
  $region50: #{mlp_forward.1} parent=0 // pred_check
    _
  $region51: #{mlp_forward.1} parent=0 // pred_check_branch
    %47 = sbr.rel (0) target = $region53
  $region52: #{mlp_forward.1} parent=0 // pred_region
    _
  $region53: #{mlp_forward.1} parent=0 // pred_fallthru
    _
  // Predicated region
  $region54: #{mlp_forward.1} parent=0 // pred_check
    _
  $region55: #{mlp_forward.1} parent=0 // pred_check_branch
    %49 = sbr.rel (0) target = $region57
  $region56: #{mlp_forward.1} parent=0 // pred_region
    _
  $region57: #{mlp_forward.1} parent=0 // pred_fallthru
    _
  // Predicated region
  $region58: #{mlp_forward.1} parent=0 // pred_check
    _
  $region59: #{mlp_forward.1} parent=0 // pred_check_branch
    %51 = sbr.rel (0) target = $region61
  $region60: #{mlp_forward.1} parent=0 // pred_region
    _
  $region61: #{mlp_forward.1} parent=0 // pred_fallthru
    _
  // Predicated region
  $region62: #{mlp_forward.1} parent=0 // pred_check
    _
  $region63: #{mlp_forward.1} parent=0 // pred_check_branch
    %53 = sbr.rel (0) target = $region65
  $region64: #{mlp_forward.1} parent=0 // pred_region
    _
  $region65: #{mlp_forward.1} parent=0 // pred_fallthru
    _
  // Predicated region
  $region66: #{mlp_forward.1} parent=0 // pred_check
    _
  $region67: #{mlp_forward.1} parent=0 // pred_check_branch
    %55 = sbr.rel (0) target = $region69
  $region68: #{mlp_forward.1} parent=0 // pred_region
    _
  $region69: #{mlp_forward.1} parent=0 // pred_fallthru
    _
  %v56 = vld [vmem:[%s1] sm:$0xff]
  %v57 = vld [vmem:[%s1 + $0x8] sm:$0xff]
  %v58 = vld [vmem:[%s1 + $0x10] sm:$0xff]
  %v59 = vld [vmem:[%s1 + $0x18] sm:$0xff]
  %v60 = vld [vmem:[%s1 + $0x20] sm:$0xff]
  %v61 = vld [vmem:[%s1 + $0x28] sm:$0xff]
  %v62 = vld [vmem:[%s1 + $0x30] sm:$0xff]
  %v63 = vld [vmem:[%s1 + $0x38] sm:$0xff]
  %v64 = vld [vmem:[%s2] sm:$0xff]
  %v65 = vld [vmem:[%s2 + $0x8] sm:$0xff]
  %v66 = vld [vmem:[%s2 + $0x10] sm:$0xff]
  %v67 = vld [vmem:[%s2 + $0x18] sm:$0xff]
  %v68 = vld [vmem:[%s2 + $0x20] sm:$0xff]
  %v69 = vld [vmem:[%s2 + $0x28] sm:$0xff]
  %v70 = vld [vmem:[%s2 + $0x30] sm:$0xff]
  %v71 = vld [vmem:[%s2 + $0x38] sm:$0xff]
  %v72 = vld [vmem:[%s2 + $0x40] sm:$0xff]
  %v73 = vld [vmem:[%s2 + $0x48] sm:$0xff]
  %v74 = vld [vmem:[%s2 + $0x50] sm:$0xff]
  %v75 = vld [vmem:[%s2 + $0x58] sm:$0xff]
  %v76 = vld [vmem:[%s2 + $0x60] sm:$0xff]
  %v77 = vld [vmem:[%s2 + $0x68] sm:$0xff]
  %v78 = vld [vmem:[%s2 + $0x70] sm:$0xff]
  %v79 = vld [vmem:[%s2 + $0x78] sm:$0xff]
  %80 = vmatprep.subr.mxu0 0.0
  %81 = vmatpush1.msra.mxu0 %v79
  %82 = vmatprep.subr.mxu0 0.0
  %83 = vmatpush1.msra.mxu0 %v78
  %84 = vmatprep.subr.mxu0 0.0
  %85 = vmatpush1.msra.mxu0 %v77
  %86 = vmatprep.subr.mxu0 0.0
  %87 = vmatpush1.msra.mxu0 %v76
  %88 = vmatprep.subr.mxu0 0.0
  %89 = vmatpush1.msra.mxu0 %v75
  %90 = vmatprep.subr.mxu0 0.0
  %91 = vmatpush1.msra.mxu0 %v74
  %92 = vmatprep.subr.mxu0 0.0
  %93 = vmatpush1.msra.mxu0 %v73
  %94 = vmatprep.subr.mxu0 0.0
  %95 = vmatpush1.msra.mxu0 %v72
  %96 = vmatprep.subr.mxu0 0.0
  %97 = vmatpush1.msra.mxu0 %v71
  %98 = vmatprep.subr.mxu0 0.0
  %99 = vmatpush1.msra.mxu0 %v70
  %100 = vmatprep.subr.mxu0 0.0
  %101 = vmatpush1.msra.mxu0 %v69
  %102 = vmatprep.subr.mxu0 0.0
  %103 = vmatpush1.msra.mxu0 %v68
  %104 = vmatprep.subr.mxu0 0.0
  %105 = vmatpush1.msra.mxu0 %v67
  %106 = vmatprep.subr.mxu0 0.0
  %107 = vmatpush1.msra.mxu0 %v66
  %108 = vmatprep.subr.mxu0 0.0
  %109 = vmatpush1.msra.mxu0 %v65
  %110 = vmatprep.subr.mxu0 0.0
  %111 = vmatpush1.msra.mxu0 %v64
  %112 = vmatprep.subr.mxu0 0.0
  %113 = vmatpush2.msra.mxu0 0.0
  %114 = vmatprep.subr.mxu0 0.0
  %115 = vmatpush2.msra.mxu0 0.0
  %116 = vmatprep.subr.mxu0 0.0
  %117 = vmatpush2.msra.mxu0 0.0
  %118 = vmatprep.subr.mxu0 0.0
  %119 = vmatpush2.msra.mxu0 0.0
  %120 = vmatprep.subr.mxu0 0.0
  %121 = vmatpush2.msra.mxu0 0.0
  %122 = vmatprep.subr.mxu0 0.0
  %123 = vmatpush2.msra.mxu0 0.0
  %124 = vmatprep.subr.mxu0 0.0
  %125 = vmatpush2.msra.mxu0 0.0
  %126 = vmatprep.subr.mxu0 0.0
  %127 = vmatpush2.msra.mxu0 0.0
  %128 = vmatprep.subr.mxu0 0.0
  %129 = vmatpush2.msra.mxu0 0.0
  %130 = vmatprep.subr.mxu0 0.0
  %131 = vmatpush2.msra.mxu0 0.0
  %132 = vmatprep.subr.mxu0 0.0
  %133 = vmatpush2.msra.mxu0 0.0
  %134 = vmatprep.subr.mxu0 0.0
  %135 = vmatpush2.msra.mxu0 0.0
  %136 = vmatprep.subr.mxu0 0.0
  %137 = vmatpush2.msra.mxu0 0.0
  %138 = vmatprep.subr.mxu0 0.0
  %139 = vmatpush2.msra.mxu0 0.0
  %140 = vmatprep.subr.mxu0 0.0
  %141 = vmatpush2.msra.mxu0 0.0
  %142 = vmatprep.subr.mxu0 0.0
  %143 = vmatpush2.msra.mxu0 0.0
  %144 = vmatprep.mubr.f32.mxu0 0.0
  %145 = vmatmul.mubr.f32.gmra.mxu0 %v56
  %v146 = vpop.f32.mrf.mxu0
  %v147 = vadd.f32 0.0, %v146
  %v148 = vpop.f32.mrf.mxu0
  %149 = vmatprep.mubr.f32.mxu0 0.0
  %150 = vmatmul.mubr.f32.gmra.mxu0 %v57
  %v151 = vpop.f32.mrf.mxu0
  %v152 = vadd.f32 0.0, %v151
  %v153 = vpop.f32.mrf.mxu0
  %154 = vmatprep.mubr.f32.mxu0 0.0
  %155 = vmatmul.mubr.f32.gmra.mxu0 %v58
  %v156 = vpop.f32.mrf.mxu0
  %v157 = vadd.f32 0.0, %v156
  %v158 = vpop.f32.mrf.mxu0
  %159 = vmatprep.mubr.f32.mxu0 0.0
  %160 = vmatmul.mubr.f32.gmra.mxu0 %v59
  %v161 = vpop.f32.mrf.mxu0
  %v162 = vadd.f32 0.0, %v161
  %v163 = vpop.f32.mrf.mxu0
  %164 = vmatprep.mubr.f32.mxu0 0.0
  %165 = vmatmul.mubr.f32.gmra.mxu0 %v60
  %v166 = vpop.f32.mrf.mxu0
  %v167 = vadd.f32 0.0, %v166
  %v168 = vpop.f32.mrf.mxu0
  %169 = vmatprep.mubr.f32.mxu0 0.0
  %170 = vmatmul.mubr.f32.gmra.mxu0 %v61
  %v171 = vpop.f32.mrf.mxu0
  %v172 = vadd.f32 0.0, %v171
  %v173 = vpop.f32.mrf.mxu0
  %174 = vmatprep.mubr.f32.mxu0 0.0
  %175 = vmatmul.mubr.f32.gmra.mxu0 %v62
  %v176 = vpop.f32.mrf.mxu0
  %v177 = vadd.f32 0.0, %v176
  %v178 = vpop.f32.mrf.mxu0
  %179 = vmatprep.mubr.f32.mxu0 0.0
  %180 = vmatmul.mubr.f32.gmra.mxu0 %v63
  %v181 = vpop.f32.mrf.mxu0
  %v182 = vadd.f32 0.0, %v181
  %v183 = vpop.f32.mrf.mxu0
  %184 = vdwg.mxu0
  %v185 = vadd.f32 %v147, %v152
  %v186 = vadd.f32 %v185, %v157
  %v187 = vadd.f32 %v186, %v162
  %v188 = vadd.f32 %v187, %v167
  %v189 = vadd.f32 %v188, %v172
  %v190 = vadd.f32 %v189, %v177
  %v191 = vadd.f32 %v190, %v182
  %v192 = vrot.slane %v191, 4
  %v193 = vadd.f32 %v191, %v192
  %v194 = vrot.slane %v193, 2
  %v195 = vadd.f32 %v193, %v194
  %v196 = vrot.slane %v195, 1
  %v197 = vadd.f32 %v195, %v196
  %v198 = vmul.f32 %v147, %v147
  %v199 = vmul.f32 %v152, %v152
  %v200 = vmul.f32 %v157, %v157
  %v201 = vmul.f32 %v162, %v162
  %v202 = vmul.f32 %v167, %v167
  %v203 = vmul.f32 %v172, %v172
  %v204 = vmul.f32 %v177, %v177
  %v205 = vmul.f32 %v182, %v182
  %v206 = vadd.f32 %v198, %v199
  %v207 = vadd.f32 %v206, %v200
  %v208 = vadd.f32 %v207, %v201
  %v209 = vadd.f32 %v208, %v202
  %v210 = vadd.f32 %v209, %v203
  %v211 = vadd.f32 %v210, %v204
  %v212 = vadd.f32 %v211, %v205
  %v213 = vrot.slane %v212, 4
  %v214 = vadd.f32 %v212, %v213
  %v215 = vrot.slane %v214, 2
  %v216 = vadd.f32 %v214, %v215
  %v217 = vrot.slane %v216, 1
  %v218 = vadd.f32 %v216, %v217
  %v219 = vmul.f32 %v197, 0.015625
  %v220 = vmul.f32 %v218, 0.015625
  %v221 = vmul.f32 %v219, %v219
  %v222 = vsub.f32 %v220, %v221
  %v223 = vmax.f32 %v222, 0.0
  %v224 = vld [vmem:[%s3] sm:$0x3]
  %v225 = vadd.f32 %v223, 1e-05
  %v226 = vrsqrt.pop %v225
  %v227 = vmul.f32 %v224, %v226
  %v228 = vmul.f32 %v219, %v227
  %v230 = vrot.slane %v228, 7
  %v232 = vsub.f32 %v224, %v230
  %v233 = vlaneseq
  %v234 = vshrl.u32 %v233, 7
  %v235 = vsub.s32 0, %v234
  %v236 = vrot.slane %v227, %v235
  %v237 = vmul.f32 %v147, %v236
  %v238 = vmul.f32 %v152, %v236
  %v239 = vmul.f32 %v157, %v236
  %v240 = vmul.f32 %v162, %v236
  %v241 = vmul.f32 %v167, %v236
  %v242 = vmul.f32 %v172, %v236
  %v243 = vmul.f32 %v177, %v236
  %v244 = vmul.f32 %v182, %v236
  %v245 = vlaneseq
  %v246 = vshrl.u32 %v245, 7
  %v247 = vsub.s32 1, %v246
  %v248 = vrot.slane %v232, %v247
  %v249 = vadd.f32 %v237, %v248
  %v250 = vadd.f32 %v238, %v248
  %v251 = vadd.f32 %v239, %v248
  %v252 = vadd.f32 %v240, %v248
  %v253 = vadd.f32 %v241, %v248
  %v254 = vadd.f32 %v242, %v248
  %v255 = vadd.f32 %v243, %v248
  %v256 = vadd.f32 %v244, %v248
  %v257 = vld [vmem:[%s4] sm:$0xff]
  %v258 = vld [vmem:[%s4 + $0x8] sm:$0xff]
  %v259 = vld [vmem:[%s4 + $0x10] sm:$0xff]
  %v260 = vld [vmem:[%s4 + $0x18] sm:$0xff]
  %v261 = vld [vmem:[%s4 + $0x20] sm:$0xff]
  %v262 = vld [vmem:[%s4 + $0x28] sm:$0xff]
  %v263 = vld [vmem:[%s4 + $0x30] sm:$0xff]
  %v264 = vld [vmem:[%s4 + $0x38] sm:$0xff]
  %v265 = vld [vmem:[%s4 + $0x40] sm:$0xff]
  %v266 = vld [vmem:[%s4 + $0x48] sm:$0xff]
  %v267 = vld [vmem:[%s4 + $0x50] sm:$0xff]
  %v268 = vld [vmem:[%s4 + $0x58] sm:$0xff]
  %v269 = vld [vmem:[%s4 + $0x60] sm:$0xff]
  %v270 = vld [vmem:[%s4 + $0x68] sm:$0xff]
  %v271 = vld [vmem:[%s4 + $0x70] sm:$0xff]
  %v272 = vld [vmem:[%s4 + $0x78] sm:$0xff]
  %273 = vmatprep.subr.mxu0 0.0
  %274 = vmatpush1.msra.mxu0 %v272
  %275 = vmatprep.subr.mxu0 0.0
  %276 = vmatpush1.msra.mxu0 %v271
  %277 = vmatprep.subr.mxu0 0.0
  %278 = vmatpush1.msra.mxu0 %v270
  %279 = vmatprep.subr.mxu0 0.0
  %280 = vmatpush1.msra.mxu0 %v269
  %281 = vmatprep.subr.mxu0 0.0
  %282 = vmatpush1.msra.mxu0 %v268
  %283 = vmatprep.subr.mxu0 0.0
  %284 = vmatpush1.msra.mxu0 %v267
  %285 = vmatprep.subr.mxu0 0.0
  %286 = vmatpush1.msra.mxu0 %v266
  %287 = vmatprep.subr.mxu0 0.0
  %288 = vmatpush1.msra.mxu0 %v265
  %289 = vmatprep.subr.mxu0 0.0
  %290 = vmatpush1.msra.mxu0 %v264
  %291 = vmatprep.subr.mxu0 0.0
  %292 = vmatpush1.msra.mxu0 %v263
  %293 = vmatprep.subr.mxu0 0.0
  %294 = vmatpush1.msra.mxu0 %v262
  %295 = vmatprep.subr.mxu0 0.0
  %296 = vmatpush1.msra.mxu0 %v261
  %297 = vmatprep.subr.mxu0 0.0
  %298 = vmatpush1.msra.mxu0 %v260
  %299 = vmatprep.subr.mxu0 0.0
  %300 = vmatpush1.msra.mxu0 %v259
  %301 = vmatprep.subr.mxu0 0.0
  %302 = vmatpush1.msra.mxu0 %v258
  %303 = vmatprep.subr.mxu0 0.0
  %304 = vmatpush1.msra.mxu0 %v257
  %305 = vmatprep.subr.mxu0 0.0
  %306 = vmatpush2.msra.mxu0 0.0
  %307 = vmatprep.subr.mxu0 0.0
  %308 = vmatpush2.msra.mxu0 0.0
  %309 = vmatprep.subr.mxu0 0.0
  %310 = vmatpush2.msra.mxu0 0.0
  %311 = vmatprep.subr.mxu0 0.0
  %312 = vmatpush2.msra.mxu0 0.0
  %313 = vmatprep.subr.mxu0 0.0
  %314 = vmatpush2.msra.mxu0 0.0
  %315 = vmatprep.subr.mxu0 0.0
  %316 = vmatpush2.msra.mxu0 0.0
  %317 = vmatprep.subr.mxu0 0.0
  %318 = vmatpush2.msra.mxu0 0.0
  %319 = vmatprep.subr.mxu0 0.0
  %320 = vmatpush2.msra.mxu0 0.0
  %321 = vmatprep.subr.mxu0 0.0
  %322 = vmatpush2.msra.mxu0 0.0
  %323 = vmatprep.subr.mxu0 0.0
  %324 = vmatpush2.msra.mxu0 0.0
  %325 = vmatprep.subr.mxu0 0.0
  %326 = vmatpush2.msra.mxu0 0.0
  %327 = vmatprep.subr.mxu0 0.0
  %328 = vmatpush2.msra.mxu0 0.0
  %329 = vmatprep.subr.mxu0 0.0
  %330 = vmatpush2.msra.mxu0 0.0
  %331 = vmatprep.subr.mxu0 0.0
  %332 = vmatpush2.msra.mxu0 0.0
  %333 = vmatprep.subr.mxu0 0.0
  %334 = vmatpush2.msra.mxu0 0.0
  %335 = vmatprep.subr.mxu0 0.0
  %336 = vmatpush2.msra.mxu0 0.0
  %337 = vmatprep.mubr.f32.mxu0 0.0
  %338 = vmatmul.mubr.f32.gmra.mxu0 %v249
  %v339 = vpop.f32.mrf.mxu0
  %v340 = vadd.f32 0.0, %v339
  %v341 = vpop.f32.mrf.mxu0
  %342 = vmatprep.mubr.f32.mxu0 0.0
  %343 = vmatmul.mubr.f32.gmra.mxu0 %v250
  %v344 = vpop.f32.mrf.mxu0
  %v345 = vadd.f32 0.0, %v344
  %v346 = vpop.f32.mrf.mxu0
  %347 = vmatprep.mubr.f32.mxu0 0.0
  %348 = vmatmul.mubr.f32.gmra.mxu0 %v251
  %v349 = vpop.f32.mrf.mxu0
  %v350 = vadd.f32 0.0, %v349
  %v351 = vpop.f32.mrf.mxu0
  %352 = vmatprep.mubr.f32.mxu0 0.0
  %353 = vmatmul.mubr.f32.gmra.mxu0 %v252
  %v354 = vpop.f32.mrf.mxu0
  %v355 = vadd.f32 0.0, %v354
  %v356 = vpop.f32.mrf.mxu0
  %357 = vmatprep.mubr.f32.mxu0 0.0
  %358 = vmatmul.mubr.f32.gmra.mxu0 %v253
  %v359 = vpop.f32.mrf.mxu0
  %v360 = vadd.f32 0.0, %v359
  %v361 = vpop.f32.mrf.mxu0
  %362 = vmatprep.mubr.f32.mxu0 0.0
  %363 = vmatmul.mubr.f32.gmra.mxu0 %v254
  %v364 = vpop.f32.mrf.mxu0
  %v365 = vadd.f32 0.0, %v364
  %v366 = vpop.f32.mrf.mxu0
  %367 = vmatprep.mubr.f32.mxu0 0.0
  %368 = vmatmul.mubr.f32.gmra.mxu0 %v255
  %v369 = vpop.f32.mrf.mxu0
  %v370 = vadd.f32 0.0, %v369
  %v371 = vpop.f32.mrf.mxu0
  %372 = vmatprep.mubr.f32.mxu0 0.0
  %373 = vmatmul.mubr.f32.gmra.mxu0 %v256
  %v374 = vpop.f32.mrf.mxu0
  %v375 = vadd.f32 0.0, %v374
  %v376 = vpop.f32.mrf.mxu0
  %377 = vdwg.mxu0
  %v378 = vadd.f32 %v340, %v345
  %v379 = vadd.f32 %v378, %v350
  %v380 = vadd.f32 %v379, %v355
  %v381 = vadd.f32 %v380, %v360
  %v382 = vadd.f32 %v381, %v365
  %v383 = vadd.f32 %v382, %v370
  %v384 = vadd.f32 %v383, %v375
  %v385 = vrot.slane %v384, 4
  %v386 = vadd.f32 %v384, %v385
  %v387 = vrot.slane %v386, 2
  %v388 = vadd.f32 %v386, %v387
  %v389 = vrot.slane %v388, 1
  %v390 = vadd.f32 %v388, %v389
  %v391 = vmul.f32 %v340, %v340
  %v392 = vmul.f32 %v345, %v345
  %v393 = vmul.f32 %v350, %v350
  %v394 = vmul.f32 %v355, %v355
  %v395 = vmul.f32 %v360, %v360
  %v396 = vmul.f32 %v365, %v365
  %v397 = vmul.f32 %v370, %v370
  %v398 = vmul.f32 %v375, %v375
  %v399 = vadd.f32 %v391, %v392
  %v400 = vadd.f32 %v399, %v393
  %v401 = vadd.f32 %v400, %v394
  %v402 = vadd.f32 %v401, %v395
  %v403 = vadd.f32 %v402, %v396
  %v404 = vadd.f32 %v403, %v397
  %v405 = vadd.f32 %v404, %v398
  %v406 = vrot.slane %v405, 4
  %v407 = vadd.f32 %v405, %v406
  %v408 = vrot.slane %v407, 2
  %v409 = vadd.f32 %v407, %v408
  %v410 = vrot.slane %v409, 1
  %v411 = vadd.f32 %v409, %v410
  %v412 = vmul.f32 %v390, 0.015625
  %v413 = vmul.f32 %v411, 0.015625
  %v414 = vmul.f32 %v412, %v412
  %v415 = vsub.f32 %v413, %v414
  %v416 = vmax.f32 %v415, 0.0
  %v417 = vld [vmem:[%s5] sm:$0x3]
  %v418 = vadd.f32 %v416, 1e-05
  %v419 = vrsqrt.pop %v418
  %v420 = vmul.f32 %v417, %v419
  %v421 = vmul.f32 %v412, %v420
  %v423 = vrot.slane %v421, 7
  %v425 = vsub.f32 %v417, %v423
  %v426 = vlaneseq
  %v427 = vshrl.u32 %v426, 7
  %v428 = vsub.s32 0, %v427
  %v429 = vrot.slane %v420, %v428
  %v430 = vmul.f32 %v340, %v429
  %v431 = vmul.f32 %v345, %v429
  %v432 = vmul.f32 %v350, %v429
  %v433 = vmul.f32 %v355, %v429
  %v434 = vmul.f32 %v360, %v429
  %v435 = vmul.f32 %v365, %v429
  %v436 = vmul.f32 %v370, %v429
  %v437 = vmul.f32 %v375, %v429
  %v438 = vlaneseq
  %v439 = vshrl.u32 %v438, 7
  %v440 = vsub.s32 1, %v439
  %v441 = vrot.slane %v425, %v440
  %v442 = vadd.f32 %v430, %v441
  %v443 = vadd.f32 %v431, %v441
  %v444 = vadd.f32 %v432, %v441
  %v445 = vadd.f32 %v433, %v441
  %v446 = vadd.f32 %v434, %v441
  %v447 = vadd.f32 %v435, %v441
  %v448 = vadd.f32 %v436, %v441
  %v449 = vadd.f32 %v437, %v441
  %v450 = vmax.f32 %v442, 0.0
  %v451 = vmax.f32 %v443, 0.0
  %v452 = vmax.f32 %v444, 0.0
  %v453 = vmax.f32 %v445, 0.0
  %v454 = vmax.f32 %v446, 0.0
  %v455 = vmax.f32 %v447, 0.0
  %v456 = vmax.f32 %v448, 0.0
  %v457 = vmax.f32 %v449, 0.0
  %v458 = vld [vmem:[%s0] sm:$0xff]
  %v459 = vld [vmem:[%s0 + $0x8] sm:$0xff]
  %v460 = vld [vmem:[%s0 + $0x10] sm:$0xff]
  %v461 = vld [vmem:[%s0 + $0x18] sm:$0xff]
  %v462 = vld [vmem:[%s0 + $0x20] sm:$0xff]
  %v463 = vld [vmem:[%s0 + $0x28] sm:$0xff]
  %v464 = vld [vmem:[%s0 + $0x30] sm:$0xff]
  %v465 = vld [vmem:[%s0 + $0x38] sm:$0xff]
  %v466 = vld [vmem:[%s6] sm:$0xff]
  %v467 = vld [vmem:[%s6 + $0x8] sm:$0xff]
  %v468 = vld [vmem:[%s6 + $0x10] sm:$0xff]
  %v469 = vld [vmem:[%s6 + $0x18] sm:$0xff]
  %v470 = vld [vmem:[%s6 + $0x20] sm:$0xff]
  %v471 = vld [vmem:[%s6 + $0x28] sm:$0xff]
  %v472 = vld [vmem:[%s6 + $0x30] sm:$0xff]
  %v473 = vld [vmem:[%s6 + $0x38] sm:$0xff]
  %v474 = vld [vmem:[%s6 + $0x40] sm:$0xff]
  %v475 = vld [vmem:[%s6 + $0x48] sm:$0xff]
  %v476 = vld [vmem:[%s6 + $0x50] sm:$0xff]
  %v477 = vld [vmem:[%s6 + $0x58] sm:$0xff]
  %v478 = vld [vmem:[%s6 + $0x60] sm:$0xff]
  %v479 = vld [vmem:[%s6 + $0x68] sm:$0xff]
  %v480 = vld [vmem:[%s6 + $0x70] sm:$0xff]
  %v481 = vld [vmem:[%s6 + $0x78] sm:$0xff]
  %482 = vmatprep.subr.mxu0 0.0
  %483 = vmatpush1.msra.mxu0 %v481
  %484 = vmatprep.subr.mxu0 0.0
  %485 = vmatpush1.msra.mxu0 %v480
  %486 = vmatprep.subr.mxu0 0.0
  %487 = vmatpush1.msra.mxu0 %v479
  %488 = vmatprep.subr.mxu0 0.0
  %489 = vmatpush1.msra.mxu0 %v478
  %490 = vmatprep.subr.mxu0 0.0
  %491 = vmatpush1.msra.mxu0 %v477
  %492 = vmatprep.subr.mxu0 0.0
  %493 = vmatpush1.msra.mxu0 %v476
  %494 = vmatprep.subr.mxu0 0.0
  %495 = vmatpush1.msra.mxu0 %v475
  %496 = vmatprep.subr.mxu0 0.0
  %497 = vmatpush1.msra.mxu0 %v474
  %498 = vmatprep.subr.mxu0 0.0
  %499 = vmatpush1.msra.mxu0 %v473
  %500 = vmatprep.subr.mxu0 0.0
  %501 = vmatpush1.msra.mxu0 %v472
  %502 = vmatprep.subr.mxu0 0.0
  %503 = vmatpush1.msra.mxu0 %v471
  %504 = vmatprep.subr.mxu0 0.0
  %505 = vmatpush1.msra.mxu0 %v470
  %506 = vmatprep.subr.mxu0 0.0
  %507 = vmatpush1.msra.mxu0 %v469
  %508 = vmatprep.subr.mxu0 0.0
  %509 = vmatpush1.msra.mxu0 %v468
  %510 = vmatprep.subr.mxu0 0.0
  %511 = vmatpush1.msra.mxu0 %v467
  %512 = vmatprep.subr.mxu0 0.0
  %513 = vmatpush1.msra.mxu0 %v466
  %514 = vmatprep.subr.mxu0 0.0
  %515 = vmatpush2.msra.mxu0 0.0
  %516 = vmatprep.subr.mxu0 0.0
  %517 = vmatpush2.msra.mxu0 0.0
  %518 = vmatprep.subr.mxu0 0.0
  %519 = vmatpush2.msra.mxu0 0.0
  %520 = vmatprep.subr.mxu0 0.0
  %521 = vmatpush2.msra.mxu0 0.0
  %522 = vmatprep.subr.mxu0 0.0
  %523 = vmatpush2.msra.mxu0 0.0
  %524 = vmatprep.subr.mxu0 0.0
  %525 = vmatpush2.msra.mxu0 0.0
  %526 = vmatprep.subr.mxu0 0.0
  %527 = vmatpush2.msra.mxu0 0.0
  %528 = vmatprep.subr.mxu0 0.0
  %529 = vmatpush2.msra.mxu0 0.0
  %530 = vmatprep.subr.mxu0 0.0
  %531 = vmatpush2.msra.mxu0 0.0
  %532 = vmatprep.subr.mxu0 0.0
  %533 = vmatpush2.msra.mxu0 0.0
  %534 = vmatprep.subr.mxu0 0.0
  %535 = vmatpush2.msra.mxu0 0.0
  %536 = vmatprep.subr.mxu0 0.0
  %537 = vmatpush2.msra.mxu0 0.0
  %538 = vmatprep.subr.mxu0 0.0
  %539 = vmatpush2.msra.mxu0 0.0
  %540 = vmatprep.subr.mxu0 0.0
  %541 = vmatpush2.msra.mxu0 0.0
  %542 = vmatprep.subr.mxu0 0.0
  %543 = vmatpush2.msra.mxu0 0.0
  %544 = vmatprep.subr.mxu0 0.0
  %545 = vmatpush2.msra.mxu0 0.0
  %546 = vmatprep.mubr.f32.mxu0 0.0
  %547 = vmatmul.mubr.f32.gmra.mxu0 %v458
  %v548 = vpop.f32.mrf.mxu0
  %v549 = vadd.f32 0.0, %v548
  %v550 = vpop.f32.mrf.mxu0
  %551 = vmatprep.mubr.f32.mxu0 0.0
  %552 = vmatmul.mubr.f32.gmra.mxu0 %v459
  %v553 = vpop.f32.mrf.mxu0
  %v554 = vadd.f32 0.0, %v553
  %v555 = vpop.f32.mrf.mxu0
  %556 = vmatprep.mubr.f32.mxu0 0.0
  %557 = vmatmul.mubr.f32.gmra.mxu0 %v460
  %v558 = vpop.f32.mrf.mxu0
  %v559 = vadd.f32 0.0, %v558
  %v560 = vpop.f32.mrf.mxu0
  %561 = vmatprep.mubr.f32.mxu0 0.0
  %562 = vmatmul.mubr.f32.gmra.mxu0 %v461
  %v563 = vpop.f32.mrf.mxu0
  %v564 = vadd.f32 0.0, %v563
  %v565 = vpop.f32.mrf.mxu0
  %566 = vmatprep.mubr.f32.mxu0 0.0
  %567 = vmatmul.mubr.f32.gmra.mxu0 %v462
  %v568 = vpop.f32.mrf.mxu0
  %v569 = vadd.f32 0.0, %v568
  %v570 = vpop.f32.mrf.mxu0
  %571 = vmatprep.mubr.f32.mxu0 0.0
  %572 = vmatmul.mubr.f32.gmra.mxu0 %v463
  %v573 = vpop.f32.mrf.mxu0
  %v574 = vadd.f32 0.0, %v573
  %v575 = vpop.f32.mrf.mxu0
  %576 = vmatprep.mubr.f32.mxu0 0.0
  %577 = vmatmul.mubr.f32.gmra.mxu0 %v464
  %v578 = vpop.f32.mrf.mxu0
  %v579 = vadd.f32 0.0, %v578
  %v580 = vpop.f32.mrf.mxu0
  %581 = vmatprep.mubr.f32.mxu0 0.0
  %582 = vmatmul.mubr.f32.gmra.mxu0 %v465
  %v583 = vpop.f32.mrf.mxu0
  %v584 = vadd.f32 0.0, %v583
  %v585 = vpop.f32.mrf.mxu0
  %586 = vdwg.mxu0
  %v587 = vadd.f32 %v549, %v554
  %v588 = vadd.f32 %v587, %v559
  %v589 = vadd.f32 %v588, %v564
  %v590 = vadd.f32 %v589, %v569
  %v591 = vadd.f32 %v590, %v574
  %v592 = vadd.f32 %v591, %v579
  %v593 = vadd.f32 %v592, %v584
  %v594 = vrot.slane %v593, 4
  %v595 = vadd.f32 %v593, %v594
  %v596 = vrot.slane %v595, 2
  %v597 = vadd.f32 %v595, %v596
  %v598 = vrot.slane %v597, 1
  %v599 = vadd.f32 %v597, %v598
  %v600 = vmul.f32 %v549, %v549
  %v601 = vmul.f32 %v554, %v554
  %v602 = vmul.f32 %v559, %v559
  %v603 = vmul.f32 %v564, %v564
  %v604 = vmul.f32 %v569, %v569
  %v605 = vmul.f32 %v574, %v574
  %v606 = vmul.f32 %v579, %v579
  %v607 = vmul.f32 %v584, %v584
  %v608 = vadd.f32 %v600, %v601
  %v609 = vadd.f32 %v608, %v602
  %v610 = vadd.f32 %v609, %v603
  %v611 = vadd.f32 %v610, %v604
  %v612 = vadd.f32 %v611, %v605
  %v613 = vadd.f32 %v612, %v606
  %v614 = vadd.f32 %v613, %v607
  %v615 = vrot.slane %v614, 4
  %v616 = vadd.f32 %v614, %v615
  %v617 = vrot.slane %v616, 2
  %v618 = vadd.f32 %v616, %v617
  %v619 = vrot.slane %v618, 1
  %v620 = vadd.f32 %v618, %v619
  %v621 = vmul.f32 %v599, 0.015625
  %v622 = vmul.f32 %v620, 0.015625
  %v623 = vmul.f32 %v621, %v621
  %v624 = vsub.f32 %v622, %v623
  %v625 = vmax.f32 %v624, 0.0
  %v626 = vld [vmem:[%s7] sm:$0x3]
  %v627 = vadd.f32 %v625, 1e-05
  %v628 = vrsqrt.pop %v627
  %v629 = vmul.f32 %v626, %v628
  %v630 = vmul.f32 %v621, %v629
  %v632 = vrot.slane %v630, 7
  %v634 = vsub.f32 %v626, %v632
  %v635 = vlaneseq
  %v636 = vshrl.u32 %v635, 7
  %v637 = vsub.s32 0, %v636
  %v638 = vrot.slane %v629, %v637
  %v639 = vmul.f32 %v549, %v638
  %v640 = vmul.f32 %v554, %v638
  %v641 = vmul.f32 %v559, %v638
  %v642 = vmul.f32 %v564, %v638
  %v643 = vmul.f32 %v569, %v638
  %v644 = vmul.f32 %v574, %v638
  %v645 = vmul.f32 %v579, %v638
  %v646 = vmul.f32 %v584, %v638
  %v647 = vlaneseq
  %v648 = vshrl.u32 %v647, 7
  %v649 = vsub.s32 1, %v648
  %v650 = vrot.slane %v634, %v649
  %v651 = vadd.f32 %v639, %v650
  %v652 = vadd.f32 %v640, %v650
  %v653 = vadd.f32 %v641, %v650
  %v654 = vadd.f32 %v642, %v650
  %v655 = vadd.f32 %v643, %v650
  %v656 = vadd.f32 %v644, %v650
  %v657 = vadd.f32 %v645, %v650
  %v658 = vadd.f32 %v646, %v650
  %v659 = vmax.f32 %v651, 0.0
  %v660 = vmax.f32 %v652, 0.0
  %v661 = vmax.f32 %v653, 0.0
  %v662 = vmax.f32 %v654, 0.0
  %v663 = vmax.f32 %v655, 0.0
  %v664 = vmax.f32 %v656, 0.0
  %v665 = vmax.f32 %v657, 0.0
  %v666 = vmax.f32 %v658, 0.0
  %v667 = vld [vmem:[%s8] sm:$0xff]
  %v668 = vld [vmem:[%s8 + $0x8] sm:$0xff]
  %v669 = vld [vmem:[%s8 + $0x10] sm:$0xff]
  %v670 = vld [vmem:[%s8 + $0x18] sm:$0xff]
  %v671 = vld [vmem:[%s8 + $0x20] sm:$0xff]
  %v672 = vld [vmem:[%s8 + $0x28] sm:$0xff]
  %v673 = vld [vmem:[%s8 + $0x30] sm:$0xff]
  %v674 = vld [vmem:[%s8 + $0x38] sm:$0xff]
  %v675 = vld [vmem:[%s8 + $0x40] sm:$0xff]
  %v676 = vld [vmem:[%s8 + $0x48] sm:$0xff]
  %v677 = vld [vmem:[%s8 + $0x50] sm:$0xff]
  %v678 = vld [vmem:[%s8 + $0x58] sm:$0xff]
  %v679 = vld [vmem:[%s8 + $0x60] sm:$0xff]
  %v680 = vld [vmem:[%s8 + $0x68] sm:$0xff]
  %v681 = vld [vmem:[%s8 + $0x70] sm:$0xff]
  %v682 = vld [vmem:[%s8 + $0x78] sm:$0xff]
  %683 = vmatprep.subr.mxu0 0.0
  %684 = vmatpush1.msra.mxu0 %v682
  %685 = vmatprep.subr.mxu0 0.0
  %686 = vmatpush1.msra.mxu0 %v681
  %687 = vmatprep.subr.mxu0 0.0
  %688 = vmatpush1.msra.mxu0 %v680
  %689 = vmatprep.subr.mxu0 0.0
  %690 = vmatpush1.msra.mxu0 %v679
  %691 = vmatprep.subr.mxu0 0.0
  %692 = vmatpush1.msra.mxu0 %v678
  %693 = vmatprep.subr.mxu0 0.0
  %694 = vmatpush1.msra.mxu0 %v677
  %695 = vmatprep.subr.mxu0 0.0
  %696 = vmatpush1.msra.mxu0 %v676
  %697 = vmatprep.subr.mxu0 0.0
  %698 = vmatpush1.msra.mxu0 %v675
  %699 = vmatprep.subr.mxu0 0.0
  %700 = vmatpush1.msra.mxu0 %v674
  %701 = vmatprep.subr.mxu0 0.0
  %702 = vmatpush1.msra.mxu0 %v673
  %703 = vmatprep.subr.mxu0 0.0
  %704 = vmatpush1.msra.mxu0 %v672
  %705 = vmatprep.subr.mxu0 0.0
  %706 = vmatpush1.msra.mxu0 %v671
  %707 = vmatprep.subr.mxu0 0.0
  %708 = vmatpush1.msra.mxu0 %v670
  %709 = vmatprep.subr.mxu0 0.0
  %710 = vmatpush1.msra.mxu0 %v669
  %711 = vmatprep.subr.mxu0 0.0
  %712 = vmatpush1.msra.mxu0 %v668
  %713 = vmatprep.subr.mxu0 0.0
  %714 = vmatpush1.msra.mxu0 %v667
  %715 = vmatprep.subr.mxu0 0.0
  %716 = vmatpush2.msra.mxu0 0.0
  %717 = vmatprep.subr.mxu0 0.0
  %718 = vmatpush2.msra.mxu0 0.0
  %719 = vmatprep.subr.mxu0 0.0
  %720 = vmatpush2.msra.mxu0 0.0
  %721 = vmatprep.subr.mxu0 0.0
  %722 = vmatpush2.msra.mxu0 0.0
  %723 = vmatprep.subr.mxu0 0.0
  %724 = vmatpush2.msra.mxu0 0.0
  %725 = vmatprep.subr.mxu0 0.0
  %726 = vmatpush2.msra.mxu0 0.0
  %727 = vmatprep.subr.mxu0 0.0
  %728 = vmatpush2.msra.mxu0 0.0
  %729 = vmatprep.subr.mxu0 0.0
  %730 = vmatpush2.msra.mxu0 0.0
  %731 = vmatprep.subr.mxu0 0.0
  %732 = vmatpush2.msra.mxu0 0.0
  %733 = vmatprep.subr.mxu0 0.0
  %734 = vmatpush2.msra.mxu0 0.0
  %735 = vmatprep.subr.mxu0 0.0
  %736 = vmatpush2.msra.mxu0 0.0
  %737 = vmatprep.subr.mxu0 0.0
  %738 = vmatpush2.msra.mxu0 0.0
  %739 = vmatprep.subr.mxu0 0.0
  %740 = vmatpush2.msra.mxu0 0.0
  %741 = vmatprep.subr.mxu0 0.0
  %742 = vmatpush2.msra.mxu0 0.0
  %743 = vmatprep.subr.mxu0 0.0
  %744 = vmatpush2.msra.mxu0 0.0
  %745 = vmatprep.subr.mxu0 0.0
  %746 = vmatpush2.msra.mxu0 0.0
  %747 = vmatprep.mubr.f32.mxu0 0.0
  %748 = vmatmul.mubr.f32.gmra.mxu0 %v659
  %v749 = vpop.f32.mrf.mxu0
  %v750 = vadd.f32 0.0, %v749
  %v751 = vpop.f32.mrf.mxu0
  %752 = vmatprep.mubr.f32.mxu0 0.0
  %753 = vmatmul.mubr.f32.gmra.mxu0 %v660
  %v754 = vpop.f32.mrf.mxu0
  %v755 = vadd.f32 0.0, %v754
  %v756 = vpop.f32.mrf.mxu0
  %757 = vmatprep.mubr.f32.mxu0 0.0
  %758 = vmatmul.mubr.f32.gmra.mxu0 %v661
  %v759 = vpop.f32.mrf.mxu0
  %v760 = vadd.f32 0.0, %v759
  %v761 = vpop.f32.mrf.mxu0
  %762 = vmatprep.mubr.f32.mxu0 0.0
  %763 = vmatmul.mubr.f32.gmra.mxu0 %v662
  %v764 = vpop.f32.mrf.mxu0
  %v765 = vadd.f32 0.0, %v764
  %v766 = vpop.f32.mrf.mxu0
  %767 = vmatprep.mubr.f32.mxu0 0.0
  %768 = vmatmul.mubr.f32.gmra.mxu0 %v663
  %v769 = vpop.f32.mrf.mxu0
  %v770 = vadd.f32 0.0, %v769
  %v771 = vpop.f32.mrf.mxu0
  %772 = vmatprep.mubr.f32.mxu0 0.0
  %773 = vmatmul.mubr.f32.gmra.mxu0 %v664
  %v774 = vpop.f32.mrf.mxu0
  %v775 = vadd.f32 0.0, %v774
  %v776 = vpop.f32.mrf.mxu0
  %777 = vmatprep.mubr.f32.mxu0 0.0
  %778 = vmatmul.mubr.f32.gmra.mxu0 %v665
  %v779 = vpop.f32.mrf.mxu0
  %v780 = vadd.f32 0.0, %v779
  %v781 = vpop.f32.mrf.mxu0
  %782 = vmatprep.mubr.f32.mxu0 0.0
  %783 = vmatmul.mubr.f32.gmra.mxu0 %v666
  %v784 = vpop.f32.mrf.mxu0
  %v785 = vadd.f32 0.0, %v784
  %v786 = vpop.f32.mrf.mxu0
  %787 = vdwg.mxu0
  %v788 = vadd.f32 %v750, %v755
  %v789 = vadd.f32 %v788, %v760
  %v790 = vadd.f32 %v789, %v765
  %v791 = vadd.f32 %v790, %v770
  %v792 = vadd.f32 %v791, %v775
  %v793 = vadd.f32 %v792, %v780
  %v794 = vadd.f32 %v793, %v785
  %v795 = vrot.slane %v794, 4
  %v796 = vadd.f32 %v794, %v795
  %v797 = vrot.slane %v796, 2
  %v798 = vadd.f32 %v796, %v797
  %v799 = vrot.slane %v798, 1
  %v800 = vadd.f32 %v798, %v799
  %v801 = vmul.f32 %v750, %v750
  %v802 = vmul.f32 %v755, %v755
  %v803 = vmul.f32 %v760, %v760
  %v804 = vmul.f32 %v765, %v765
  %v805 = vmul.f32 %v770, %v770
  %v806 = vmul.f32 %v775, %v775
  %v807 = vmul.f32 %v780, %v780
  %v808 = vmul.f32 %v785, %v785
  %v809 = vadd.f32 %v801, %v802
  %v810 = vadd.f32 %v809, %v803
  %v811 = vadd.f32 %v810, %v804
  %v812 = vadd.f32 %v811, %v805
  %v813 = vadd.f32 %v812, %v806
  %v814 = vadd.f32 %v813, %v807
  %v815 = vadd.f32 %v814, %v808
  %v816 = vrot.slane %v815, 4
  %v817 = vadd.f32 %v815, %v816
  %v818 = vrot.slane %v817, 2
  %v819 = vadd.f32 %v817, %v818
  %v820 = vrot.slane %v819, 1
  %v821 = vadd.f32 %v819, %v820
  %v822 = vmul.f32 %v800, 0.015625
  %v823 = vmul.f32 %v821, 0.015625
  %v824 = vmul.f32 %v822, %v822
  %v825 = vsub.f32 %v823, %v824
  %v826 = vmax.f32 %v825, 0.0
  %v827 = vld [vmem:[%s9] sm:$0x3]
  %v828 = vadd.f32 %v826, 1e-05
  %v829 = vrsqrt.pop %v828
  %v830 = vmul.f32 %v827, %v829
  %v831 = vmul.f32 %v822, %v830
  %v833 = vrot.slane %v831, 7
  %v835 = vsub.f32 %v827, %v833
  %v836 = vlaneseq
  %v837 = vshrl.u32 %v836, 7
  %v838 = vsub.s32 0, %v837
  %v839 = vrot.slane %v830, %v838
  %v840 = vmul.f32 %v750, %v839
  %v841 = vmul.f32 %v755, %v839
  %v842 = vmul.f32 %v760, %v839
  %v843 = vmul.f32 %v765, %v839
  %v844 = vmul.f32 %v770, %v839
  %v845 = vmul.f32 %v775, %v839
  %v846 = vmul.f32 %v780, %v839
  %v847 = vmul.f32 %v785, %v839
  %v848 = vlaneseq
  %v849 = vshrl.u32 %v848, 7
  %v850 = vsub.s32 1, %v849
  %v851 = vrot.slane %v835, %v850
  %v852 = vadd.f32 %v840, %v851
  %v853 = vadd.f32 %v841, %v851
  %v854 = vadd.f32 %v842, %v851
  %v855 = vadd.f32 %v843, %v851
  %v856 = vadd.f32 %v844, %v851
  %v857 = vadd.f32 %v845, %v851
  %v858 = vadd.f32 %v846, %v851
  %v859 = vadd.f32 %v847, %v851
  %v860 = vmax.f32 %v852, 0.0
  %v861 = vmax.f32 %v853, 0.0
  %v862 = vmax.f32 %v854, 0.0
  %v863 = vmax.f32 %v855, 0.0
  %v864 = vmax.f32 %v856, 0.0
  %v865 = vmax.f32 %v857, 0.0
  %v866 = vmax.f32 %v858, 0.0
  %v867 = vmax.f32 %v859, 0.0
  %v868 = vld [vmem:[%s10] sm:$0xff]
  %v869 = vld [vmem:[%s10 + $0x8] sm:$0xff]
  %v870 = vld [vmem:[%s10 + $0x10] sm:$0xff]
  %v871 = vld [vmem:[%s10 + $0x18] sm:$0xff]
  %v872 = vld [vmem:[%s10 + $0x20] sm:$0xff]
  %v873 = vld [vmem:[%s10 + $0x28] sm:$0xff]
  %v874 = vld [vmem:[%s10 + $0x30] sm:$0xff]
  %v875 = vld [vmem:[%s10 + $0x38] sm:$0xff]
  %v876 = vld [vmem:[%s10 + $0x40] sm:$0xff]
  %v877 = vld [vmem:[%s10 + $0x48] sm:$0xff]
  %v878 = vld [vmem:[%s10 + $0x50] sm:$0xff]
  %v879 = vld [vmem:[%s10 + $0x58] sm:$0xff]
  %v880 = vld [vmem:[%s10 + $0x60] sm:$0xff]
  %v881 = vld [vmem:[%s10 + $0x68] sm:$0xff]
  %v882 = vld [vmem:[%s10 + $0x70] sm:$0xff]
  %v883 = vld [vmem:[%s10 + $0x78] sm:$0xff]
  %v884 = vld [vmem:[%s11] sm:$0xff]
  %v885 = vld [vmem:[%s11 + $0x8] sm:$0xff]
  %v886 = vld [vmem:[%s11 + $0x10] sm:$0xff]
  %v887 = vld [vmem:[%s11 + $0x18] sm:$0xff]
  %v888 = vld [vmem:[%s11 + $0x20] sm:$0xff]
  %v889 = vld [vmem:[%s11 + $0x28] sm:$0xff]
  %v890 = vld [vmem:[%s11 + $0x30] sm:$0xff]
  %v891 = vld [vmem:[%s11 + $0x38] sm:$0xff]
  %v892 = vld [vmem:[%s11 + $0x40] sm:$0xff]
  %v893 = vld [vmem:[%s11 + $0x48] sm:$0xff]
  %v894 = vld [vmem:[%s11 + $0x50] sm:$0xff]
  %v895 = vld [vmem:[%s11 + $0x58] sm:$0xff]
  %v896 = vld [vmem:[%s11 + $0x60] sm:$0xff]
  %v897 = vld [vmem:[%s11 + $0x68] sm:$0xff]
  %v898 = vld [vmem:[%s11 + $0x70] sm:$0xff]
  %v899 = vld [vmem:[%s11 + $0x78] sm:$0xff]
  %900 = vmatprep.subr.mxu0 0.0
  %901 = vmatpush1.msra.mxu0 %v899
  %902 = vmatprep.subr.mxu0 0.0
  %903 = vmatpush1.msra.mxu0 %v898
  %904 = vmatprep.subr.mxu0 0.0
  %905 = vmatpush1.msra.mxu0 %v897
  %906 = vmatprep.subr.mxu0 0.0
  %907 = vmatpush1.msra.mxu0 %v896
  %908 = vmatprep.subr.mxu0 0.0
  %909 = vmatpush1.msra.mxu0 %v895
  %910 = vmatprep.subr.mxu0 0.0
  %911 = vmatpush1.msra.mxu0 %v894
  %912 = vmatprep.subr.mxu0 0.0
  %913 = vmatpush1.msra.mxu0 %v893
  %914 = vmatprep.subr.mxu0 0.0
  %915 = vmatpush1.msra.mxu0 %v892
  %916 = vmatprep.subr.mxu0 0.0
  %917 = vmatpush1.msra.mxu0 %v891
  %918 = vmatprep.subr.mxu0 0.0
  %919 = vmatpush1.msra.mxu0 %v890
  %920 = vmatprep.subr.mxu0 0.0
  %921 = vmatpush1.msra.mxu0 %v889
  %922 = vmatprep.subr.mxu0 0.0
  %923 = vmatpush1.msra.mxu0 %v888
  %924 = vmatprep.subr.mxu0 0.0
  %925 = vmatpush1.msra.mxu0 %v887
  %926 = vmatprep.subr.mxu0 0.0
  %927 = vmatpush1.msra.mxu0 %v886
  %928 = vmatprep.subr.mxu0 0.0
  %929 = vmatpush1.msra.mxu0 %v885
  %930 = vmatprep.subr.mxu0 0.0
  %931 = vmatpush1.msra.mxu0 %v884
  %932 = vmatprep.subr.mxu0 0.0
  %933 = vmatpush2.msra.mxu0 0.0
  %934 = vmatprep.subr.mxu0 0.0
  %935 = vmatpush2.msra.mxu0 0.0
  %936 = vmatprep.subr.mxu0 0.0
  %937 = vmatpush2.msra.mxu0 0.0
  %938 = vmatprep.subr.mxu0 0.0
  %939 = vmatpush2.msra.mxu0 0.0
  %940 = vmatprep.subr.mxu0 0.0
  %941 = vmatpush2.msra.mxu0 0.0
  %942 = vmatprep.subr.mxu0 0.0
  %943 = vmatpush2.msra.mxu0 0.0
  %944 = vmatprep.subr.mxu0 0.0
  %945 = vmatpush2.msra.mxu0 0.0
  %946 = vmatprep.subr.mxu0 0.0
  %947 = vmatpush2.msra.mxu0 0.0
  %948 = vmatprep.subr.mxu0 0.0
  %949 = vmatpush2.msra.mxu0 0.0
  %950 = vmatprep.subr.mxu0 0.0
  %951 = vmatpush2.msra.mxu0 0.0
  %952 = vmatprep.subr.mxu0 0.0
  %953 = vmatpush2.msra.mxu0 0.0
  %954 = vmatprep.subr.mxu0 0.0
  %955 = vmatpush2.msra.mxu0 0.0
  %956 = vmatprep.subr.mxu0 0.0
  %957 = vmatpush2.msra.mxu0 0.0
  %958 = vmatprep.subr.mxu0 0.0
  %959 = vmatpush2.msra.mxu0 0.0
  %960 = vmatprep.subr.mxu0 0.0
  %961 = vmatpush2.msra.mxu0 0.0
  %962 = vmatprep.subr.mxu0 0.0
  %963 = vmatpush2.msra.mxu0 0.0
  %964 = vmatprep.mubr.f32.mxu0 0.0
  %965 = vmatmul.mubr.f32.gmra.mxu0 %v450
  %v966 = vpop.f32.mrf.mxu0
  %v967 = vadd.f32 0.0, %v966
  %v968 = vpop.f32.mrf.mxu0
  %969 = vmatprep.mubr.f32.mxu0 0.0
  %970 = vmatmul.mubr.f32.gmra.mxu0 %v451
  %v971 = vpop.f32.mrf.mxu0
  %v972 = vadd.f32 0.0, %v971
  %v973 = vpop.f32.mrf.mxu0
  %974 = vmatprep.mubr.f32.mxu0 0.0
  %975 = vmatmul.mubr.f32.gmra.mxu0 %v452
  %v976 = vpop.f32.mrf.mxu0
  %v977 = vadd.f32 0.0, %v976
  %v978 = vpop.f32.mrf.mxu0
  %979 = vmatprep.mubr.f32.mxu0 0.0
  %980 = vmatmul.mubr.f32.gmra.mxu0 %v453
  %v981 = vpop.f32.mrf.mxu0
  %v982 = vadd.f32 0.0, %v981
  %v983 = vpop.f32.mrf.mxu0
  %984 = vmatprep.mubr.f32.mxu0 0.0
  %985 = vmatmul.mubr.f32.gmra.mxu0 %v454
  %v986 = vpop.f32.mrf.mxu0
  %v987 = vadd.f32 0.0, %v986
  %v988 = vpop.f32.mrf.mxu0
  %989 = vmatprep.mubr.f32.mxu0 0.0
  %990 = vmatmul.mubr.f32.gmra.mxu0 %v455
  %v991 = vpop.f32.mrf.mxu0
  %v992 = vadd.f32 0.0, %v991
  %v993 = vpop.f32.mrf.mxu0
  %994 = vmatprep.mubr.f32.mxu0 0.0
  %995 = vmatmul.mubr.f32.gmra.mxu0 %v456
  %v996 = vpop.f32.mrf.mxu0
  %v997 = vadd.f32 0.0, %v996
  %v998 = vpop.f32.mrf.mxu0
  %999 = vmatprep.mubr.f32.mxu0 0.0
  %1000 = vmatmul.mubr.f32.gmra.mxu0 %v457
  %v1001 = vpop.f32.mrf.mxu0
  %v1002 = vadd.f32 0.0, %v1001
  %v1003 = vpop.f32.mrf.mxu0
  %1004 = vdwg.mxu0
  %1005 = vmatprep.subr.mxu0 0.0
  %1006 = vmatpush1.msra.mxu0 %v883
  %1007 = vmatprep.subr.mxu0 0.0
  %1008 = vmatpush1.msra.mxu0 %v882
  %1009 = vmatprep.subr.mxu0 0.0
  %1010 = vmatpush1.msra.mxu0 %v881
  %1011 = vmatprep.subr.mxu0 0.0
  %1012 = vmatpush1.msra.mxu0 %v880
  %1013 = vmatprep.subr.mxu0 0.0
  %1014 = vmatpush1.msra.mxu0 %v879
  %1015 = vmatprep.subr.mxu0 0.0
  %1016 = vmatpush1.msra.mxu0 %v878
  %1017 = vmatprep.subr.mxu0 0.0
  %1018 = vmatpush1.msra.mxu0 %v877
  %1019 = vmatprep.subr.mxu0 0.0
  %1020 = vmatpush1.msra.mxu0 %v876
  %1021 = vmatprep.subr.mxu0 0.0
  %1022 = vmatpush1.msra.mxu0 %v875
  %1023 = vmatprep.subr.mxu0 0.0
  %1024 = vmatpush1.msra.mxu0 %v874
  %1025 = vmatprep.subr.mxu0 0.0
  %1026 = vmatpush1.msra.mxu0 %v873
  %1027 = vmatprep.subr.mxu0 0.0
  %1028 = vmatpush1.msra.mxu0 %v872
  %1029 = vmatprep.subr.mxu0 0.0
  %1030 = vmatpush1.msra.mxu0 %v871
  %1031 = vmatprep.subr.mxu0 0.0
  %1032 = vmatpush1.msra.mxu0 %v870
  %1033 = vmatprep.subr.mxu0 0.0
  %1034 = vmatpush1.msra.mxu0 %v869
  %1035 = vmatprep.subr.mxu0 0.0
  %1036 = vmatpush1.msra.mxu0 %v868
  %1037 = vmatprep.subr.mxu0 0.0
  %1038 = vmatpush2.msra.mxu0 0.0
  %1039 = vmatprep.subr.mxu0 0.0
  %1040 = vmatpush2.msra.mxu0 0.0
  %1041 = vmatprep.subr.mxu0 0.0
  %1042 = vmatpush2.msra.mxu0 0.0
  %1043 = vmatprep.subr.mxu0 0.0
  %1044 = vmatpush2.msra.mxu0 0.0
  %1045 = vmatprep.subr.mxu0 0.0
  %1046 = vmatpush2.msra.mxu0 0.0
  %1047 = vmatprep.subr.mxu0 0.0
  %1048 = vmatpush2.msra.mxu0 0.0
  %1049 = vmatprep.subr.mxu0 0.0
  %1050 = vmatpush2.msra.mxu0 0.0
  %1051 = vmatprep.subr.mxu0 0.0
  %1052 = vmatpush2.msra.mxu0 0.0
  %1053 = vmatprep.subr.mxu0 0.0
  %1054 = vmatpush2.msra.mxu0 0.0
  %1055 = vmatprep.subr.mxu0 0.0
  %1056 = vmatpush2.msra.mxu0 0.0
  %1057 = vmatprep.subr.mxu0 0.0
  %1058 = vmatpush2.msra.mxu0 0.0
  %1059 = vmatprep.subr.mxu0 0.0
  %1060 = vmatpush2.msra.mxu0 0.0
  %1061 = vmatprep.subr.mxu0 0.0
  %1062 = vmatpush2.msra.mxu0 0.0
  %1063 = vmatprep.subr.mxu0 0.0
  %1064 = vmatpush2.msra.mxu0 0.0
  %1065 = vmatprep.subr.mxu0 0.0
  %1066 = vmatpush2.msra.mxu0 0.0
  %1067 = vmatprep.subr.mxu0 0.0
  %1068 = vmatpush2.msra.mxu0 0.0
  %1069 = vmatprep.mubr.f32.mxu0 0.0
  %1070 = vmatmul.mubr.f32.gmra.mxu0 %v860
  %v1071 = vpop.f32.mrf.mxu0
  %v1072 = vadd.f32 %v967, %v1071
  %v1073 = vpop.f32.mrf.mxu0
  %1074 = vmatprep.mubr.f32.mxu0 0.0
  %1075 = vmatmul.mubr.f32.gmra.mxu0 %v861
  %v1076 = vpop.f32.mrf.mxu0
  %v1077 = vadd.f32 %v972, %v1076
  %v1078 = vpop.f32.mrf.mxu0
  %1079 = vmatprep.mubr.f32.mxu0 0.0
  %1080 = vmatmul.mubr.f32.gmra.mxu0 %v862
  %v1081 = vpop.f32.mrf.mxu0
  %v1082 = vadd.f32 %v977, %v1081
  %v1083 = vpop.f32.mrf.mxu0
  %1084 = vmatprep.mubr.f32.mxu0 0.0
  %1085 = vmatmul.mubr.f32.gmra.mxu0 %v863
  %v1086 = vpop.f32.mrf.mxu0
  %v1087 = vadd.f32 %v982, %v1086
  %v1088 = vpop.f32.mrf.mxu0
  %1089 = vmatprep.mubr.f32.mxu0 0.0
  %1090 = vmatmul.mubr.f32.gmra.mxu0 %v864
  %v1091 = vpop.f32.mrf.mxu0
  %v1092 = vadd.f32 %v987, %v1091
  %v1093 = vpop.f32.mrf.mxu0
  %1094 = vmatprep.mubr.f32.mxu0 0.0
  %1095 = vmatmul.mubr.f32.gmra.mxu0 %v865
  %v1096 = vpop.f32.mrf.mxu0
  %v1097 = vadd.f32 %v992, %v1096
  %v1098 = vpop.f32.mrf.mxu0
  %1099 = vmatprep.mubr.f32.mxu0 0.0
  %1100 = vmatmul.mubr.f32.gmra.mxu0 %v866
  %v1101 = vpop.f32.mrf.mxu0
  %v1102 = vadd.f32 %v997, %v1101
  %v1103 = vpop.f32.mrf.mxu0
  %1104 = vmatprep.mubr.f32.mxu0 0.0
  %1105 = vmatmul.mubr.f32.gmra.mxu0 %v867
  %v1106 = vpop.f32.mrf.mxu0
  %v1107 = vadd.f32 %v1002, %v1106
  %v1108 = vpop.f32.mrf.mxu0
  %1109 = vdwg.mxu0
  %v1110 = vadd.f32 %v1072, %v1077
  %v1111 = vadd.f32 %v1110, %v1082
  %v1112 = vadd.f32 %v1111, %v1087
  %v1113 = vadd.f32 %v1112, %v1092
  %v1114 = vadd.f32 %v1113, %v1097
  %v1115 = vadd.f32 %v1114, %v1102
  %v1116 = vadd.f32 %v1115, %v1107
  %v1117 = vrot.slane %v1116, 4
  %v1118 = vadd.f32 %v1116, %v1117
  %v1119 = vrot.slane %v1118, 2
  %v1120 = vadd.f32 %v1118, %v1119
  %v1121 = vrot.slane %v1120, 1
  %v1122 = vadd.f32 %v1120, %v1121
  %v1123 = vmul.f32 %v1072, %v1072
  %v1124 = vmul.f32 %v1077, %v1077
  %v1125 = vmul.f32 %v1082, %v1082
  %v1126 = vmul.f32 %v1087, %v1087
  %v1127 = vmul.f32 %v1092, %v1092
  %v1128 = vmul.f32 %v1097, %v1097
  %v1129 = vmul.f32 %v1102, %v1102
  %v1130 = vmul.f32 %v1107, %v1107
  %v1131 = vadd.f32 %v1123, %v1124
  %v1132 = vadd.f32 %v1131, %v1125
  %v1133 = vadd.f32 %v1132, %v1126
  %v1134 = vadd.f32 %v1133, %v1127
  %v1135 = vadd.f32 %v1134, %v1128
  %v1136 = vadd.f32 %v1135, %v1129
  %v1137 = vadd.f32 %v1136, %v1130
  %v1138 = vrot.slane %v1137, 4
  %v1139 = vadd.f32 %v1137, %v1138
  %v1140 = vrot.slane %v1139, 2
  %v1141 = vadd.f32 %v1139, %v1140
  %v1142 = vrot.slane %v1141, 1
  %v1143 = vadd.f32 %v1141, %v1142
  %v1144 = vmul.f32 %v1122, 0.015625
  %v1145 = vmul.f32 %v1143, 0.015625
  %v1146 = vmul.f32 %v1144, %v1144
  %v1147 = vsub.f32 %v1145, %v1146
  %v1148 = vmax.f32 %v1147, 0.0
  %v1149 = vld [vmem:[%s12] sm:$0x3]
  %v1150 = vadd.f32 %v1148, 1e-05
  %v1151 = vrsqrt.pop %v1150
  %v1152 = vmul.f32 %v1149, %v1151
  %v1153 = vmul.f32 %v1144, %v1152
  %v1155 = vrot.slane %v1153, 7
  %v1157 = vsub.f32 %v1149, %v1155
  %v1158 = vlaneseq
  %v1159 = vshrl.u32 %v1158, 7
  %v1160 = vsub.s32 0, %v1159
  %v1161 = vrot.slane %v1152, %v1160
  %v1162 = vmul.f32 %v1072, %v1161
  %v1163 = vmul.f32 %v1077, %v1161
  %v1164 = vmul.f32 %v1082, %v1161
  %v1165 = vmul.f32 %v1087, %v1161
  %v1166 = vmul.f32 %v1092, %v1161
  %v1167 = vmul.f32 %v1097, %v1161
  %v1168 = vmul.f32 %v1102, %v1161
  %v1169 = vmul.f32 %v1107, %v1161
  %v1170 = vlaneseq
  %v1171 = vshrl.u32 %v1170, 7
  %v1172 = vsub.s32 1, %v1171
  %v1173 = vrot.slane %v1157, %v1172
  %v1174 = vadd.f32 %v1162, %v1173
  %v1175 = vadd.f32 %v1163, %v1173
  %v1176 = vadd.f32 %v1164, %v1173
  %v1177 = vadd.f32 %v1165, %v1173
  %v1178 = vadd.f32 %v1166, %v1173
  %v1179 = vadd.f32 %v1167, %v1173
  %v1180 = vadd.f32 %v1168, %v1173
  %v1181 = vadd.f32 %v1169, %v1173
  %v1182 = vmax.f32 %v1174, 0.0
  %v1183 = vmax.f32 %v1175, 0.0
  %v1184 = vmax.f32 %v1176, 0.0
  %v1185 = vmax.f32 %v1177, 0.0
  %v1186 = vmax.f32 %v1178, 0.0
  %v1187 = vmax.f32 %v1179, 0.0
  %v1188 = vmax.f32 %v1180, 0.0
  %v1189 = vmax.f32 %v1181, 0.0
  %v1190 = vld [vmem:[%s13] sm:$0xff]
  %v1191 = vld [vmem:[%s13 + $0x8] sm:$0xff]
  %v1192 = vld [vmem:[%s13 + $0x10] sm:$0xff]
  %v1193 = vld [vmem:[%s13 + $0x18] sm:$0xff]
  %v1194 = vld [vmem:[%s13 + $0x20] sm:$0xff]
  %v1195 = vld [vmem:[%s13 + $0x28] sm:$0xff]
  %v1196 = vld [vmem:[%s13 + $0x30] sm:$0xff]
  %v1197 = vld [vmem:[%s13 + $0x38] sm:$0xff]
  %v1198 = vld [vmem:[%s13 + $0x40] sm:$0xff]
  %v1199 = vld [vmem:[%s13 + $0x48] sm:$0xff]
  %v1200 = vld [vmem:[%s13 + $0x50] sm:$0xff]
  %v1201 = vld [vmem:[%s13 + $0x58] sm:$0xff]
  %v1202 = vld [vmem:[%s13 + $0x60] sm:$0xff]
  %v1203 = vld [vmem:[%s13 + $0x68] sm:$0xff]
  %v1204 = vld [vmem:[%s13 + $0x70] sm:$0xff]
  %v1205 = vld [vmem:[%s13 + $0x78] sm:$0xff]
  %1206 = vmatprep.subr.mxu0 0.0
  %1207 = vmatpush1.msra.mxu0 %v1205
  %1208 = vmatprep.subr.mxu0 0.0
  %1209 = vmatpush1.msra.mxu0 %v1204
  %1210 = vmatprep.subr.mxu0 0.0
  %1211 = vmatpush1.msra.mxu0 %v1203
  %1212 = vmatprep.subr.mxu0 0.0
  %1213 = vmatpush1.msra.mxu0 %v1202
  %1214 = vmatprep.subr.mxu0 0.0
  %1215 = vmatpush1.msra.mxu0 %v1201
  %1216 = vmatprep.subr.mxu0 0.0
  %1217 = vmatpush1.msra.mxu0 %v1200
  %1218 = vmatprep.subr.mxu0 0.0
  %1219 = vmatpush1.msra.mxu0 %v1199
  %1220 = vmatprep.subr.mxu0 0.0
  %1221 = vmatpush1.msra.mxu0 %v1198
  %1222 = vmatprep.subr.mxu0 0.0
  %1223 = vmatpush1.msra.mxu0 %v1197
  %1224 = vmatprep.subr.mxu0 0.0
  %1225 = vmatpush1.msra.mxu0 %v1196
  %1226 = vmatprep.subr.mxu0 0.0
  %1227 = vmatpush1.msra.mxu0 %v1195
  %1228 = vmatprep.subr.mxu0 0.0
  %1229 = vmatpush1.msra.mxu0 %v1194
  %1230 = vmatprep.subr.mxu0 0.0
  %1231 = vmatpush1.msra.mxu0 %v1193
  %1232 = vmatprep.subr.mxu0 0.0
  %1233 = vmatpush1.msra.mxu0 %v1192
  %1234 = vmatprep.subr.mxu0 0.0
  %1235 = vmatpush1.msra.mxu0 %v1191
  %1236 = vmatprep.subr.mxu0 0.0
  %1237 = vmatpush1.msra.mxu0 %v1190
  %1238 = vmatprep.subr.mxu0 0.0
  %1239 = vmatpush2.msra.mxu0 0.0
  %1240 = vmatprep.subr.mxu0 0.0
  %1241 = vmatpush2.msra.mxu0 0.0
  %1242 = vmatprep.subr.mxu0 0.0
  %1243 = vmatpush2.msra.mxu0 0.0
  %1244 = vmatprep.subr.mxu0 0.0
  %1245 = vmatpush2.msra.mxu0 0.0
  %1246 = vmatprep.subr.mxu0 0.0
  %1247 = vmatpush2.msra.mxu0 0.0
  %1248 = vmatprep.subr.mxu0 0.0
  %1249 = vmatpush2.msra.mxu0 0.0
  %1250 = vmatprep.subr.mxu0 0.0
  %1251 = vmatpush2.msra.mxu0 0.0
  %1252 = vmatprep.subr.mxu0 0.0
  %1253 = vmatpush2.msra.mxu0 0.0
  %1254 = vmatprep.subr.mxu0 0.0
  %1255 = vmatpush2.msra.mxu0 0.0
  %1256 = vmatprep.subr.mxu0 0.0
  %1257 = vmatpush2.msra.mxu0 0.0
  %1258 = vmatprep.subr.mxu0 0.0
  %1259 = vmatpush2.msra.mxu0 0.0
  %1260 = vmatprep.subr.mxu0 0.0
  %1261 = vmatpush2.msra.mxu0 0.0
  %1262 = vmatprep.subr.mxu0 0.0
  %1263 = vmatpush2.msra.mxu0 0.0
  %1264 = vmatprep.subr.mxu0 0.0
  %1265 = vmatpush2.msra.mxu0 0.0
  %1266 = vmatprep.subr.mxu0 0.0
  %1267 = vmatpush2.msra.mxu0 0.0
  %1268 = vmatprep.subr.mxu0 0.0
  %1269 = vmatpush2.msra.mxu0 0.0
  %1270 = vmatprep.mubr.f32.mxu0 0.0
  %1271 = vmatmul.mubr.f32.gmra.mxu0 %v1182
  %v1272 = vpop.f32.mrf.mxu0
  %v1273 = vadd.f32 0.0, %v1272
  %v1274 = vpop.f32.mrf.mxu0
  %1275 = vmatprep.mubr.f32.mxu0 0.0
  %1276 = vmatmul.mubr.f32.gmra.mxu0 %v1183
  %v1277 = vpop.f32.mrf.mxu0
  %v1278 = vadd.f32 0.0, %v1277
  %v1279 = vpop.f32.mrf.mxu0
  %1280 = vmatprep.mubr.f32.mxu0 0.0
  %1281 = vmatmul.mubr.f32.gmra.mxu0 %v1184
  %v1282 = vpop.f32.mrf.mxu0
  %v1283 = vadd.f32 0.0, %v1282
  %v1284 = vpop.f32.mrf.mxu0
  %1285 = vmatprep.mubr.f32.mxu0 0.0
  %1286 = vmatmul.mubr.f32.gmra.mxu0 %v1185
  %v1287 = vpop.f32.mrf.mxu0
  %v1288 = vadd.f32 0.0, %v1287
  %v1289 = vpop.f32.mrf.mxu0
  %1290 = vmatprep.mubr.f32.mxu0 0.0
  %1291 = vmatmul.mubr.f32.gmra.mxu0 %v1186
  %v1292 = vpop.f32.mrf.mxu0
  %v1293 = vadd.f32 0.0, %v1292
  %v1294 = vpop.f32.mrf.mxu0
  %1295 = vmatprep.mubr.f32.mxu0 0.0
  %1296 = vmatmul.mubr.f32.gmra.mxu0 %v1187
  %v1297 = vpop.f32.mrf.mxu0
  %v1298 = vadd.f32 0.0, %v1297
  %v1299 = vpop.f32.mrf.mxu0
  %1300 = vmatprep.mubr.f32.mxu0 0.0
  %1301 = vmatmul.mubr.f32.gmra.mxu0 %v1188
  %v1302 = vpop.f32.mrf.mxu0
  %v1303 = vadd.f32 0.0, %v1302
  %v1304 = vpop.f32.mrf.mxu0
  %1305 = vmatprep.mubr.f32.mxu0 0.0
  %1306 = vmatmul.mubr.f32.gmra.mxu0 %v1189
  %v1307 = vpop.f32.mrf.mxu0
  %v1308 = vadd.f32 0.0, %v1307
  %v1309 = vpop.f32.mrf.mxu0
  %1310 = vdwg.mxu0
  %v1311 = vadd.f32 %v1273, %v1278
  %v1312 = vadd.f32 %v1311, %v1283
  %v1313 = vadd.f32 %v1312, %v1288
  %v1314 = vadd.f32 %v1313, %v1293
  %v1315 = vadd.f32 %v1314, %v1298
  %v1316 = vadd.f32 %v1315, %v1303
  %v1317 = vadd.f32 %v1316, %v1308
  %v1318 = vrot.slane %v1317, 4
  %v1319 = vadd.f32 %v1317, %v1318
  %v1320 = vrot.slane %v1319, 2
  %v1321 = vadd.f32 %v1319, %v1320
  %v1322 = vrot.slane %v1321, 1
  %v1323 = vadd.f32 %v1321, %v1322
  %v1324 = vmul.f32 %v1273, %v1273
  %v1325 = vmul.f32 %v1278, %v1278
  %v1326 = vmul.f32 %v1283, %v1283
  %v1327 = vmul.f32 %v1288, %v1288
  %v1328 = vmul.f32 %v1293, %v1293
  %v1329 = vmul.f32 %v1298, %v1298
  %v1330 = vmul.f32 %v1303, %v1303
  %v1331 = vmul.f32 %v1308, %v1308
  %v1332 = vadd.f32 %v1324, %v1325
  %v1333 = vadd.f32 %v1332, %v1326
  %v1334 = vadd.f32 %v1333, %v1327
  %v1335 = vadd.f32 %v1334, %v1328
  %v1336 = vadd.f32 %v1335, %v1329
  %v1337 = vadd.f32 %v1336, %v1330
  %v1338 = vadd.f32 %v1337, %v1331
  %v1339 = vrot.slane %v1338, 4
  %v1340 = vadd.f32 %v1338, %v1339
  %v1341 = vrot.slane %v1340, 2
  %v1342 = vadd.f32 %v1340, %v1341
  %v1343 = vrot.slane %v1342, 1
  %v1344 = vadd.f32 %v1342, %v1343
  %v1345 = vmul.f32 %v1323, 0.015625
  %v1346 = vmul.f32 %v1344, 0.015625
  %v1347 = vmul.f32 %v1345, %v1345
  %v1348 = vsub.f32 %v1346, %v1347
  %v1349 = vmax.f32 %v1348, 0.0
  %v1350 = vld [vmem:[%s14] sm:$0x3]
  %v1351 = vadd.f32 %v1349, 1e-05
  %v1352 = vrsqrt.pop %v1351
  %v1353 = vmul.f32 %v1350, %v1352
  %v1354 = vmul.f32 %v1345, %v1353
  %v1356 = vrot.slane %v1354, 7
  %v1358 = vsub.f32 %v1350, %v1356
  %v1359 = vlaneseq
  %v1360 = vshrl.u32 %v1359, 7
  %v1361 = vsub.s32 0, %v1360
  %v1362 = vrot.slane %v1353, %v1361
  %v1363 = vmul.f32 %v1273, %v1362
  %v1364 = vmul.f32 %v1278, %v1362
  %v1365 = vmul.f32 %v1283, %v1362
  %v1366 = vmul.f32 %v1288, %v1362
  %v1367 = vmul.f32 %v1293, %v1362
  %v1368 = vmul.f32 %v1298, %v1362
  %v1369 = vmul.f32 %v1303, %v1362
  %v1370 = vmul.f32 %v1308, %v1362
  %v1371 = vlaneseq
  %v1372 = vshrl.u32 %v1371, 7
  %v1373 = vsub.s32 1, %v1372
  %v1374 = vrot.slane %v1358, %v1373
  %v1375 = vadd.f32 %v1363, %v1374
  %v1376 = vadd.f32 %v1364, %v1374
  %v1377 = vadd.f32 %v1365, %v1374
  %v1378 = vadd.f32 %v1366, %v1374
  %v1379 = vadd.f32 %v1367, %v1374
  %v1380 = vadd.f32 %v1368, %v1374
  %v1381 = vadd.f32 %v1369, %v1374
  %v1382 = vadd.f32 %v1370, %v1374
  %v1383 = vmax.f32 %v1375, 0.0
  %v1384 = vmax.f32 %v1376, 0.0
  %v1385 = vmax.f32 %v1377, 0.0
  %v1386 = vmax.f32 %v1378, 0.0
  %v1387 = vmax.f32 %v1379, 0.0
  %v1388 = vmax.f32 %v1380, 0.0
  %v1389 = vmax.f32 %v1381, 0.0
  %v1390 = vmax.f32 %v1382, 0.0
  %v1391 = vld [vmem:[%s15] sm:$0xff]
  %v1392 = vld [vmem:[%s15 + $0x8] sm:$0xff]
  %v1393 = vld [vmem:[%s15 + $0x10] sm:$0xff]
  %v1394 = vld [vmem:[%s15 + $0x18] sm:$0xff]
  %v1395 = vld [vmem:[%s15 + $0x20] sm:$0xff]
  %v1396 = vld [vmem:[%s15 + $0x28] sm:$0xff]
  %v1397 = vld [vmem:[%s15 + $0x30] sm:$0xff]
  %v1398 = vld [vmem:[%s15 + $0x38] sm:$0xff]
  %v1399 = vld [vmem:[%s15 + $0x40] sm:$0xff]
  %v1400 = vld [vmem:[%s15 + $0x48] sm:$0xff]
  %v1401 = vld [vmem:[%s15 + $0x50] sm:$0xff]
  %v1402 = vld [vmem:[%s15 + $0x58] sm:$0xff]
  %v1403 = vld [vmem:[%s15 + $0x60] sm:$0xff]
  %v1404 = vld [vmem:[%s15 + $0x68] sm:$0xff]
  %v1405 = vld [vmem:[%s15 + $0x70] sm:$0xff]
  %v1406 = vld [vmem:[%s15 + $0x78] sm:$0xff]
  %v1407 = vld [vmem:[%s16] sm:$0x1]
  %v1409 = vlaneseq
  %v1410 = vshrl.u32 %v1409, 7
  %v1411 = vsub.s32 0, %v1410
  %v1412 = vrot.slane %v1407, %v1411
  %1414 = vmatprep.subr.mxu0 0.0
  %1415 = vmatpush1.msra.mxu0 %v1406
  %1416 = vmatprep.subr.mxu0 0.0
  %1417 = vmatpush1.msra.mxu0 %v1405
  %1418 = vmatprep.subr.mxu0 0.0
  %1419 = vmatpush1.msra.mxu0 %v1404
  %1420 = vmatprep.subr.mxu0 0.0
  %1421 = vmatpush1.msra.mxu0 %v1403
  %1422 = vmatprep.subr.mxu0 0.0
  %1423 = vmatpush1.msra.mxu0 %v1402
  %1424 = vmatprep.subr.mxu0 0.0
  %1425 = vmatpush1.msra.mxu0 %v1401
  %1426 = vmatprep.subr.mxu0 0.0
  %1427 = vmatpush1.msra.mxu0 %v1400
  %1428 = vmatprep.subr.mxu0 0.0
  %1429 = vmatpush1.msra.mxu0 %v1399
  %1430 = vmatprep.subr.mxu0 0.0
  %1431 = vmatpush1.msra.mxu0 %v1398
  %1432 = vmatprep.subr.mxu0 0.0
  %1433 = vmatpush1.msra.mxu0 %v1397
  %1434 = vmatprep.subr.mxu0 0.0
  %1435 = vmatpush1.msra.mxu0 %v1396
  %1436 = vmatprep.subr.mxu0 0.0
  %1437 = vmatpush1.msra.mxu0 %v1395
  %1438 = vmatprep.subr.mxu0 0.0
  %1439 = vmatpush1.msra.mxu0 %v1394
  %1440 = vmatprep.subr.mxu0 0.0
  %1441 = vmatpush1.msra.mxu0 %v1393
  %1442 = vmatprep.subr.mxu0 0.0
  %1443 = vmatpush1.msra.mxu0 %v1392
  %1444 = vmatprep.subr.mxu0 0.0
  %1445 = vmatpush1.msra.mxu0 %v1391
  %1446 = vmatprep.subr.mxu0 0.0
  %1447 = vmatpush2.msra.mxu0 0.0
  %1448 = vmatprep.subr.mxu0 0.0
  %1449 = vmatpush2.msra.mxu0 0.0
  %1450 = vmatprep.subr.mxu0 0.0
  %1451 = vmatpush2.msra.mxu0 0.0
  %1452 = vmatprep.subr.mxu0 0.0
  %1453 = vmatpush2.msra.mxu0 0.0
  %1454 = vmatprep.subr.mxu0 0.0
  %1455 = vmatpush2.msra.mxu0 0.0
  %1456 = vmatprep.subr.mxu0 0.0
  %1457 = vmatpush2.msra.mxu0 0.0
  %1458 = vmatprep.subr.mxu0 0.0
  %1459 = vmatpush2.msra.mxu0 0.0
  %1460 = vmatprep.subr.mxu0 0.0
  %1461 = vmatpush2.msra.mxu0 0.0
  %1462 = vmatprep.subr.mxu0 0.0
  %1463 = vmatpush2.msra.mxu0 0.0
  %1464 = vmatprep.subr.mxu0 0.0
  %1465 = vmatpush2.msra.mxu0 0.0
  %1466 = vmatprep.subr.mxu0 0.0
  %1467 = vmatpush2.msra.mxu0 0.0
  %1468 = vmatprep.subr.mxu0 0.0
  %1469 = vmatpush2.msra.mxu0 0.0
  %1470 = vmatprep.subr.mxu0 0.0
  %1471 = vmatpush2.msra.mxu0 0.0
  %1472 = vmatprep.subr.mxu0 0.0
  %1473 = vmatpush2.msra.mxu0 0.0
  %1474 = vmatprep.subr.mxu0 0.0
  %1475 = vmatpush2.msra.mxu0 0.0
  %1476 = vmatprep.subr.mxu0 0.0
  %1477 = vmatpush2.msra.mxu0 0.0
  %1478 = vmatprep.mubr.f32.mxu0 0.0
  %1479 = vmatmul.mubr.f32.gmra.mxu0 %v1383
  %v1480 = vpop.f32.mrf.mxu0
  %v1481 = vadd.f32 %v1412, %v1480
  %v1482 = vpop.f32.mrf.mxu0
  %1483 = vmatprep.mubr.f32.mxu0 0.0
  %1484 = vmatmul.mubr.f32.gmra.mxu0 %v1384
  %v1485 = vpop.f32.mrf.mxu0
  %v1486 = vadd.f32 %v1412, %v1485
  %v1487 = vpop.f32.mrf.mxu0
  %1488 = vmatprep.mubr.f32.mxu0 0.0
  %1489 = vmatmul.mubr.f32.gmra.mxu0 %v1385
  %v1490 = vpop.f32.mrf.mxu0
  %v1491 = vadd.f32 %v1412, %v1490
  %v1492 = vpop.f32.mrf.mxu0
  %1493 = vmatprep.mubr.f32.mxu0 0.0
  %1494 = vmatmul.mubr.f32.gmra.mxu0 %v1386
  %v1495 = vpop.f32.mrf.mxu0
  %v1496 = vadd.f32 %v1412, %v1495
  %v1497 = vpop.f32.mrf.mxu0
  %1498 = vmatprep.mubr.f32.mxu0 0.0
  %1499 = vmatmul.mubr.f32.gmra.mxu0 %v1387
  %v1500 = vpop.f32.mrf.mxu0
  %v1501 = vadd.f32 %v1412, %v1500
  %v1502 = vpop.f32.mrf.mxu0
  %1503 = vmatprep.mubr.f32.mxu0 0.0
  %1504 = vmatmul.mubr.f32.gmra.mxu0 %v1388
  %v1505 = vpop.f32.mrf.mxu0
  %v1506 = vadd.f32 %v1412, %v1505
  %v1507 = vpop.f32.mrf.mxu0
  %1508 = vmatprep.mubr.f32.mxu0 0.0
  %1509 = vmatmul.mubr.f32.gmra.mxu0 %v1389
  %v1510 = vpop.f32.mrf.mxu0
  %v1511 = vadd.f32 %v1412, %v1510
  %v1512 = vpop.f32.mrf.mxu0
  %1513 = vmatprep.mubr.f32.mxu0 0.0
  %1514 = vmatmul.mubr.f32.gmra.mxu0 %v1390
  %v1515 = vpop.f32.mrf.mxu0
  %v1516 = vadd.f32 %v1412, %v1515
  %v1517 = vpop.f32.mrf.mxu0
  %1518 = vdwg.mxu0
  %1519 = vst [vmem:[%s17] sm:$0xff] %v1481
  %1520 = vst [vmem:[%s17 + $0x8] sm:$0xff] %v1486
  %1521 = vst [vmem:[%s17 + $0x10] sm:$0xff] %v1491
  %1522 = vst [vmem:[%s17 + $0x18] sm:$0xff] %v1496
  %1523 = vst [vmem:[%s17 + $0x20] sm:$0xff] %v1501
  %1524 = vst [vmem:[%s17 + $0x28] sm:$0xff] %v1506
  %1525 = vst [vmem:[%s17 + $0x30] sm:$0xff] %v1511
  %1526 = vst [vmem:[%s17 + $0x38] sm:$0xff] %v1516
  // Predicated region
  $region70: #{mlp_forward.1} parent=0 // pred_check
    _
  $region71: #{mlp_forward.1} parent=0 // pred_check_branch
    %1528 = sbr.rel (0) target = $region73
  $region72: #{mlp_forward.1} parent=0 // pred_region
    _
  $region73: #{mlp_forward.1} parent=0 // pred_fallthru
    _
  // Predicated region
  $region74: #{mlp_forward.1} parent=0 // pred_check
    _
  $region75: #{mlp_forward.1} parent=0 // pred_check_branch
    %1530 = sbr.rel (0) target = $region77
  $region76: #{mlp_forward.1} parent=0 // pred_region
    _
  $region77: #{mlp_forward.1} parent=0 // pred_fallthru
    _

</llo_original>
